<compile_context>
chip_gen: v6e
topology: v6e:2x2x1
jax: 0.10.0
libtpu: 0.0.40
codegen_flags: <defaults>
</compile_context>

<pallas_src>
import functools

import jax
import jax.numpy as jnp
import numpy as np
from jax import lax
from jax.experimental import pallas as pl
from jax.experimental.pallas import tpu as pltpu


# --------------------------------------------------------------------------
# Kernel: one (image n, repeat r) grid step of
#   y   = LeakyReLU(BN2(conv3x3(LeakyReLU(BN1(conv1x1(act))))))
#   act = act + y   (if use_residual)
# The running activation lives in the output VMEM block (same block index
# across the repeat axis), so x is read once and only the final activation
# is written back to HBM per image.
# --------------------------------------------------------------------------
def _residual_block_kernel(x_ref, w1_ref, s1_ref, b1_ref, w2_ref, s2_ref,
                           b2_ref, o_ref, *, width, use_residual):
    r = pl.program_id(1)
    _, HW, C = x_ref.shape
    Cm = w1_ref.shape[2]
    W = width
    H = HW // W
    mxu_dtype = w1_ref.dtype            # bf16 weights -> bf16 MXU operands

    # Seed the resident activation with the input image on the first repeat.
    @pl.when(r == 0)
    def _():
        o_ref[0] = x_ref[0]

    x2 = o_ref[0]                                           # (HW, C) f32

    # ---- CNNBlock 1: 1x1 conv == channel matmul (MXU, f32 acc),
    #      fused BN, LeakyReLU(0.1) ----
    h = jnp.dot(x2.astype(mxu_dtype), w1_ref[r],
                preferred_element_type=jnp.float32)         # (HW, Cm)
    h = h * s1_ref[r] + b1_ref[r]
    h = jnp.where(h > 0, h, 0.1 * h)

    # ---- CNNBlock 2: 3x3 conv, padding=1 ----
    # kw-halo: roll along the flattened row axis (XLU sublane rotate; no
    # scratch round trip, no misaligned stores) + edge mask at j==0 / j==W-1.
    col = lax.broadcasted_iota(jnp.int32, (HW, 1), 0) % W
    left = jnp.where(col >= 1, pltpu.roll(h, shift=1, axis=0), 0.0)        # h[i, j-1]
    right = jnp.where(col <= W - 2, pltpu.roll(h, shift=HW - 1, axis=0), 0.0)  # h[i, j+1]
    # Single bf16 cast at 3*Cm width (vs 9*Cm im2col previously).
    hcat = jnp.concatenate([left, h, right], axis=1).astype(mxu_dtype)     # (HW, 3*Cm)

    # kh decomposition: three accumulating K=3*Cm MXU matmuls against
    # row-shifted (major-dim sliced) views of hcat; f32 accumulator.
    w2 = w2_ref[r]                                          # (9*Cm, C), K=(kh, kw, cm)
    acc = jnp.dot(hcat, w2[3 * Cm:6 * Cm],
                  preferred_element_type=jnp.float32)       # kh = 0 (center rows)
    top = jnp.dot(hcat[:(H - 1) * W], w2[0:3 * Cm],
                  preferred_element_type=jnp.float32)       # kh = -1 -> output rows 1..H-1
    bot = jnp.dot(hcat[W:], w2[6 * Cm:9 * Cm],
                  preferred_element_type=jnp.float32)       # kh = +1 -> output rows 0..H-2
    zrow = jnp.zeros((W, C), jnp.float32)
    acc = acc + jnp.concatenate([zrow, top], axis=0) \
              + jnp.concatenate([bot, zrow], axis=0)

    y = acc * s2_ref[r] + b2_ref[r]
    y = jnp.where(y > 0, y, 0.1 * y)

    # Residual add and resident activation stay f32.
    o_ref[0] = x2 + y if use_residual else y


def _vmem_limit_bytes():
    # Per-generation scoped-VMEM budget: ~half of physical VMEM, capped at
    # 64 MiB (v5e/v6e: 128 MiB physical, v7x: 64 MiB physical).
    try:
        cap = pltpu.get_tpu_info().vmem_capacity_bytes
    except Exception:
        cap = 64 * 1024 * 1024
    return int(max(16 * 1024 * 1024, min(cap // 2, 64 * 1024 * 1024)))


def residual_block(x, w1, s1, b1, w2, s2, b2, *, use_residual=True):
    """Full ResidualBlock forward in one pallas_call.

    x : (N, H, W, C) f32, NHWC
    w1: (R, C, Cm)     bf16   stacked 1x1 conv weights
    s1: (R, 1, Cm) f32, b1: (R, 1, Cm) f32  (fused BN1)
    w2: (R, 9*Cm, C)   bf16   stacked 3x3 conv weights, K ordered (kh, kw, cm)
    s2: (R, 1, C)  f32, b2: (R, 1, C)  f32  (fused BN2)
    """
    N, H, W, C = x.shape
    R, _, Cm = w1.shape
    HW = H * W
    x2 = x.reshape(N, HW, C)
    kernel = functools.partial(_residual_block_kernel, width=W,
                               use_residual=use_residual)
    out = pl.pallas_call(
        kernel,
        out_shape=jax.ShapeDtypeStruct((N, HW, C), x.dtype),
        grid_spec=pltpu.PrefetchScalarGridSpec(
            num_scalar_prefetch=0,
            grid=(N, R),                 # repeat axis innermost: act stays resident
            in_specs=[
                pl.BlockSpec((1, HW, C), lambda n, r: (n, 0, 0)),        # x
                # Weight / BN stacks: constant block index -> DMA'd once,
                # resident in VMEM, indexed by r inside the kernel.
                pl.BlockSpec((R, C, Cm), lambda n, r: (0, 0, 0)),        # w1
                pl.BlockSpec((R, 1, Cm), lambda n, r: (0, 0, 0)),        # bn1 scale
                pl.BlockSpec((R, 1, Cm), lambda n, r: (0, 0, 0)),        # bn1 bias
                pl.BlockSpec((R, 9 * Cm, C), lambda n, r: (0, 0, 0)),    # w2
                pl.BlockSpec((R, 1, C), lambda n, r: (0, 0, 0)),         # bn2 scale
                pl.BlockSpec((R, 1, C), lambda n, r: (0, 0, 0)),         # bn2 bias
            ],
            out_specs=pl.BlockSpec((1, HW, C), lambda n, r: (n, 0, 0)),
        ),
        compiler_params=pltpu.CompilerParams(
            dimension_semantics=("parallel", "arbitrary"),
            vmem_limit_bytes=_vmem_limit_bytes()),
    )(x2, w1, s1, b1, w2, s2, b2)
    return out.reshape(N, H, W, C)


# --------------------------------------------------------------------------
# Deterministic parameter init (synthetic; shapes match the nn.Module).
# Conv weights are rounded to bf16 (and kept as f32 masters) so the bf16
# MXU path loses no weight precision relative to the f32 reference.
# --------------------------------------------------------------------------
def init_params(key, channels, num_repeats, eps=1e-5):
    C, Cm = channels, channels // 2
    w1s, s1s, b1s, w2s, s2s, b2s, w2h = [], [], [], [], [], [], []
    for _ in range(num_repeats):
        key, *ks = jax.random.split(key, 11)
        w1 = jax.random.normal(ks[0], (C, Cm), jnp.float32) * 0.1
        g1 = jax.random.uniform(ks[1], (Cm,), jnp.float32, 0.5, 1.5)
        be1 = jax.random.normal(ks[2], (Cm,), jnp.float32) * 0.1
        m1 = jax.random.normal(ks[3], (Cm,), jnp.float32) * 0.1
        v1 = jax.random.uniform(ks[4], (Cm,), jnp.float32, 0.5, 1.5)
        w2 = jax.random.normal(ks[5], (3, 3, Cm, C), jnp.float32) * 0.1   # HWIO
        g2 = jax.random.uniform(ks[6], (C,), jnp.float32, 0.5, 1.5)
        be2 = jax.random.normal(ks[7], (C,), jnp.float32) * 0.1
        m2 = jax.random.normal(ks[8], (C,), jnp.float32) * 0.1
        v2 = jax.random.uniform(ks[9], (C,), jnp.float32, 0.5, 1.5)

        w1 = w1.astype(jnp.bfloat16).astype(jnp.float32)
        w2 = w2.astype(jnp.bfloat16).astype(jnp.float32)
        s1 = g1 / jnp.sqrt(v1 + eps); b1 = be1 - m1 * s1
        s2 = g2 / jnp.sqrt(v2 + eps); b2 = be2 - m2 * s2

        w1s.append(w1); s1s.append(s1.reshape(1, Cm)); b1s.append(b1.reshape(1, Cm))
        w2h.append(w2); w2s.append(w2.reshape(9 * Cm, C))     # (kh, kw, cm) in K
        s2s.append(s2.reshape(1, C)); b2s.append(b2.reshape(1, C))

    return dict(
        w1=jnp.stack(w1s).astype(jnp.bfloat16),      # (R, C, Cm)
        s1=jnp.stack(s1s), b1=jnp.stack(b1s),        # (R, 1, Cm)
        w2=jnp.stack(w2s).astype(jnp.bfloat16),      # (R, 9*Cm, C)
        s2=jnp.stack(s2s), b2=jnp.stack(b2s),        # (R, 1, C)
        w1_f32=jnp.stack(w1s), w2_hwio=jnp.stack(w2h),
    )


# --------------------------------------------------------------------------
# Pure-JAX f32 reference (module semantics) for correctness check.
# --------------------------------------------------------------------------
def ref_forward(x, p, *, use_residual=True):
    dn = ('NHWC', 'HWIO', 'NHWC')
    R = p['w1_f32'].shape[0]
    for r in range(R):
        w1 = p['w1_f32'][r].reshape(1, 1, *p['w1_f32'][r].shape)
        h = lax.conv_general_dilated(x, w1, (1, 1), 'VALID', dimension_numbers=dn)
        h = h * p['s1'][r] + p['b1'][r]
        h = jnp.where(h > 0, h, 0.1 * h)
        y = lax.conv_general_dilated(h, p['w2_hwio'][r], (1, 1), 'SAME',
                                     dimension_numbers=dn)
        y = y * p['s2'][r] + p['b2'][r]
        y = jnp.where(y > 0, y, 0.1 * y)
        x = x + y if use_residual else y
    return x


if __name__ == "__main__":
    N, H, W, C = 2, 16, 16, 8          # NHWC; NCHW equivalent: (2, 8, 16, 16)
    NUM_REPEATS = 2
    USE_RESIDUAL = True

    key = jax.random.PRNGKey(0)
    key, xk, pk = jax.random.split(key, 3)
    x = jax.random.normal(xk, (N, H, W, C), jnp.float32)
    p = init_params(pk, C, NUM_REPEATS)

    out = residual_block(x, p['w1'], p['s1'], p['b1'], p['w2'], p['s2'], p['b2'],
                         use_residual=USE_RESIDUAL)
    out = jax.block_until_ready(out)

    ref = ref_forward(x, p, use_residual=USE_RESIDUAL)
    # Kernel uses bf16 MXU operands (weights are exactly bf16-representable),
    # so differences vs. the f32 reference come only from activation rounding.
    np.testing.assert_allclose(np.asarray(out), np.asarray(ref),
                               rtol=2e-2, atol=2e-2)
    print("KERNEL_OK")
</pallas_src>

<mosaic_0001>
module attributes {stable_mosaic.version = 11 : i64} {
  func.func @_residual_block_kernel(%arg0: i32, %arg1: i32, %arg2: memref<1x256x8xf32, #tpu.memory_space<vmem>>, %arg3: memref<2x8x4xbf16, #tpu.memory_space<vmem>>, %arg4: memref<2x1x4xf32, #tpu.memory_space<vmem>>, %arg5: memref<2x1x4xf32, #tpu.memory_space<vmem>>, %arg6: memref<2x36x8xbf16, #tpu.memory_space<vmem>>, %arg7: memref<2x1x8xf32, #tpu.memory_space<vmem>>, %arg8: memref<2x1x8xf32, #tpu.memory_space<vmem>>, %arg9: memref<1x256x8xf32, #tpu.memory_space<vmem>>) attributes {dimension_semantics = [#tpu.dimension_semantics<parallel>, #tpu.dimension_semantics<arbitrary>], iteration_bounds = array<i64: 2, 2>, scalar_prefetch = 0 : i64, scratch_operands = 0 : i64, tpu.core_type = #tpu.core_type<tc>, window_params = [{transform_indices = @transform_0, window_bounds = array<i64: 1, 256, 8>}, {pipeline_mode = #tpu.pipeline_mode<synchronous>, transform_indices = @transform_1, window_bounds = array<i64: 2, 8, 4>}, {pipeline_mode = #tpu.pipeline_mode<synchronous>, transform_indices = @transform_2, window_bounds = array<i64: 2, 1, 4>}, {pipeline_mode = #tpu.pipeline_mode<synchronous>, transform_indices = @transform_3, window_bounds = array<i64: 2, 1, 4>}, {pipeline_mode = #tpu.pipeline_mode<synchronous>, transform_indices = @transform_4, window_bounds = array<i64: 2, 36, 8>}, {pipeline_mode = #tpu.pipeline_mode<synchronous>, transform_indices = @transform_5, window_bounds = array<i64: 2, 1, 8>}, {pipeline_mode = #tpu.pipeline_mode<synchronous>, transform_indices = @transform_6, window_bounds = array<i64: 2, 1, 8>}, {transform_indices = @transform_7, window_bounds = array<i64: 1, 256, 8>}]} {
    %c0_i32 = arith.constant 0 : i32
    %0 = arith.cmpi eq, %arg1, %c0_i32 : i32
    %1 = arith.extui %0 : i1 to i32
    %c0_i32_0 = arith.constant 0 : i32
    %2 = arith.cmpi ne, %1, %c0_i32_0 : i32
    scf.if %2 {
      %c0_34 = arith.constant 0 : index
      %c0_35 = arith.constant 0 : index
      %c0_36 = arith.constant 0 : index
      %93 = vector.load %arg2[%c0_34, %c0_35, %c0_36] : memref<1x256x8xf32, #tpu.memory_space<vmem>>, vector<1x256x8xf32>
      %94 = vector.shape_cast %93 : vector<1x256x8xf32> to vector<256x8xf32>
      %c0_37 = arith.constant 0 : index
      %c0_38 = arith.constant 0 : index
      %c0_39 = arith.constant 0 : index
      %95 = vector.load %arg9[%c0_37, %c0_38, %c0_39] : memref<1x256x8xf32, #tpu.memory_space<vmem>>, vector<1x256x8xf32>
      %96 = vector.shape_cast %95 : vector<1x256x8xf32> to vector<256x8xf32>
      %97 = vector.shape_cast %94 : vector<256x8xf32> to vector<1x256x8xf32>
      tpu.vector_store %arg9[%c0_37, %c0_38, %c0_39], %97 {strides = array<i32>} : memref<1x256x8xf32, #tpu.memory_space<vmem>>, vector<1x256x8xf32>,
    } else {
    }
    %c0 = arith.constant 0 : index
    %c0_1 = arith.constant 0 : index
    %c0_2 = arith.constant 0 : index
    %3 = vector.load %arg9[%c0, %c0_1, %c0_2] : memref<1x256x8xf32, #tpu.memory_space<vmem>>, vector<1x256x8xf32>
    %4 = vector.shape_cast %3 : vector<1x256x8xf32> to vector<256x8xf32>
    %5 = arith.truncf %4 : vector<256x8xf32> to vector<256x8xbf16>
    %6 = arith.index_cast %arg1 : i32 to index
    %c0_3 = arith.constant 0 : index
    %c0_4 = arith.constant 0 : index
    %7 = vector.load %arg3[%6, %c0_3, %c0_4] : memref<2x8x4xbf16, #tpu.memory_space<vmem>>, vector<1x8x4xbf16>
    %8 = vector.shape_cast %7 : vector<1x8x4xbf16> to vector<8x4xbf16>
    %cst = arith.constant dense<0.000000e+00> : vector<256x4xf32>
    %9 = tpu.matmul %5, %8, %cst {dimension_numbers = #tpu.dot_dimension_numbers<[1], [0], [0], [1], [0, 0, 1, 1], [], []>} : vector<256x8xbf16>, vector<8x4xbf16>, vector<256x4xf32> -> vector<256x4xf32>
    %10 = arith.index_cast %arg1 : i32 to index
    %c0_5 = arith.constant 0 : index
    %c0_6 = arith.constant 0 : index
    %11 = vector.load %arg4[%10, %c0_5, %c0_6] : memref<2x1x4xf32, #tpu.memory_space<vmem>>, vector<1x1x4xf32>
    %12 = vector.shape_cast %11 : vector<1x1x4xf32> to vector<1x4xf32>
    %13 = vector.broadcast %12 : vector<1x4xf32> to vector<256x4xf32>
    %14 = arith.mulf %9, %13 : vector<256x4xf32>
    %15 = arith.index_cast %arg1 : i32 to index
    %c0_7 = arith.constant 0 : index
    %c0_8 = arith.constant 0 : index
    %16 = vector.load %arg5[%15, %c0_7, %c0_8] : memref<2x1x4xf32, #tpu.memory_space<vmem>>, vector<1x1x4xf32>
    %17 = vector.shape_cast %16 : vector<1x1x4xf32> to vector<1x4xf32>
    %18 = vector.broadcast %17 : vector<1x4xf32> to vector<256x4xf32>
    %19 = arith.addf %14, %18 : vector<256x4xf32>
    %cst_9 = arith.constant 0.000000e+00 : f32
    %20 = vector.broadcast %cst_9 : f32 to vector<256x4xf32>
    %21 = arith.cmpf ogt, %19, %20 : vector<256x4xf32>
    %cst_10 = arith.constant 1.000000e-01 : f32
    %22 = vector.broadcast %cst_10 : f32 to vector<256x4xf32>
    %23 = arith.mulf %22, %19 : vector<256x4xf32>
    %24 = arith.select %21, %19, %23 : vector<256x4xi1>, vector<256x4xf32>
    %25 = tpu.iota {dimensions = array<i32: 0>} : vector<256x1xi32>
    %c16_i32 = arith.constant 16 : i32
    %c0_i32_11 = arith.constant 0 : i32
    %26 = arith.cmpi eq, %c16_i32, %c0_i32_11 : i32
    %c1_i32 = arith.constant 1 : i32
    %27 = arith.select %26, %c1_i32, %c16_i32 : i32
    %28 = vector.broadcast %27 : i32 to vector<256x1xi32>
    %29 = arith.remsi %25, %28 : vector<256x1xi32>
    %c0_i32_12 = arith.constant 0 : i32
    %30 = vector.broadcast %c0_i32_12 : i32 to vector<256x1xi32>
    %31 = arith.cmpi ne, %29, %30 : vector<256x1xi32>
    %c0_i32_13 = arith.constant 0 : i32
    %32 = vector.broadcast %c0_i32_13 : i32 to vector<256x1xi32>
    %33 = arith.cmpi slt, %29, %32 : vector<256x1xi32>
    %c0_i32_14 = arith.constant 0 : i32
    %34 = arith.cmpi slt, %27, %c0_i32_14 : i32
    %35 = vector.broadcast %34 : i1 to vector<256x1xi1>
    %36 = vector.broadcast %35 : vector<256x1xi1> to vector<256x1xi1>
    %37 = arith.xori %33, %36 : vector<256x1xi1>
    %38 = arith.andi %37, %31 : vector<256x1xi1>
    %39 = vector.broadcast %27 : i32 to vector<256x1xi32>
    %40 = arith.addi %29, %39 : vector<256x1xi32>
    %41 = arith.select %38, %40, %29 : vector<256x1xi1>, vector<256x1xi32>
    %c1_i32_15 = arith.constant 1 : i32
    %42 = vector.broadcast %c1_i32_15 : i32 to vector<256x1xi32>
    %43 = arith.cmpi sge, %41, %42 : vector<256x1xi32>
    %c1_i32_16 = arith.constant 1 : i32
    %44 = tpu.dynamic_rotate %24 by %c1_i32_16 dim 0 : vector<256x4xf32>, i32 -> vector<256x4xf32>
    %cst_17 = arith.constant 0.000000e+00 : f32
    %45 = vector.shape_cast %43 : vector<256x1xi1> to vector<256x1xi1>
    %46 = vector.broadcast %45 : vector<256x1xi1> to vector<256x4xi1>
    %47 = vector.broadcast %cst_17 : f32 to vector<256x4xf32>
    %48 = arith.select %46, %44, %47 : vector<256x4xi1>, vector<256x4xf32>
    %c14_i32 = arith.constant 14 : i32
    %49 = vector.broadcast %c14_i32 : i32 to vector<256x1xi32>
    %50 = arith.cmpi sle, %41, %49 : vector<256x1xi32>
    %c255_i32 = arith.constant 255 : i32
    %51 = tpu.dynamic_rotate %24 by %c255_i32 dim 0 : vector<256x4xf32>, i32 -> vector<256x4xf32>
    %cst_18 = arith.constant 0.000000e+00 : f32
    %52 = vector.shape_cast %50 : vector<256x1xi1> to vector<256x1xi1>
    %53 = vector.broadcast %52 : vector<256x1xi1> to vector<256x4xi1>
    %54 = vector.broadcast %cst_18 : f32 to vector<256x4xf32>
    %55 = arith.select %53, %51, %54 : vector<256x4xi1>, vector<256x4xf32>
    %56 = tpu.concatenate %48, %24, %55 in 1 : vector<256x4xf32>, vector<256x4xf32>, vector<256x4xf32> -> vector<256x12xf32>
    %57 = arith.truncf %56 : vector<256x12xf32> to vector<256x12xbf16>
    %58 = arith.index_cast %arg1 : i32 to index
    %c0_19 = arith.constant 0 : index
    %c0_20 = arith.constant 0 : index
    %59 = vector.load %arg6[%58, %c0_19, %c0_20] : memref<2x36x8xbf16, #tpu.memory_space<vmem>>, vector<1x36x8xbf16>
    %60 = vector.shape_cast %59 : vector<1x36x8xbf16> to vector<36x8xbf16>
    %61 = vector.extract_strided_slice %60 {offsets = [12, 0], sizes = [12, 8], strides = [1, 1]} : vector<36x8xbf16> to vector<12x8xbf16>
    %cst_21 = arith.constant dense<0.000000e+00> : vector<256x8xf32>
    %62 = tpu.matmul %57, %61, %cst_21 {dimension_numbers = #tpu.dot_dimension_numbers<[1], [0], [0], [1], [0, 0, 1, 1], [], []>} : vector<256x12xbf16>, vector<12x8xbf16>, vector<256x8xf32> -> vector<256x8xf32>
    %63 = vector.extract_strided_slice %57 {offsets = [0, 0], sizes = [240, 12], strides = [1, 1]} : vector<256x12xbf16> to vector<240x12xbf16>
    %64 = vector.extract_strided_slice %60 {offsets = [0, 0], sizes = [12, 8], strides = [1, 1]} : vector<36x8xbf16> to vector<12x8xbf16>
    %cst_22 = arith.constant dense<0.000000e+00> : vector<240x8xf32>
    %65 = tpu.matmul %63, %64, %cst_22 {dimension_numbers = #tpu.dot_dimension_numbers<[1], [0], [0], [1], [0, 0, 1, 1], [], []>} : vector<240x12xbf16>, vector<12x8xbf16>, vector<240x8xf32> -> vector<240x8xf32>
    %66 = vector.extract_strided_slice %57 {offsets = [16, 0], sizes = [240, 12], strides = [1, 1]} : vector<256x12xbf16> to vector<240x12xbf16>
    %67 = vector.extract_strided_slice %60 {offsets = [24, 0], sizes = [12, 8], strides = [1, 1]} : vector<36x8xbf16> to vector<12x8xbf16>
    %cst_23 = arith.constant dense<0.000000e+00> : vector<240x8xf32>
    %68 = tpu.matmul %66, %67, %cst_23 {dimension_numbers = #tpu.dot_dimension_numbers<[1], [0], [0], [1], [0, 0, 1, 1], [], []>} : vector<240x12xbf16>, vector<12x8xbf16>, vector<240x8xf32> -> vector<240x8xf32>
    %cst_24 = arith.constant 0.000000e+00 : f32
    %69 = vector.broadcast %cst_24 : f32 to vector<16x8xf32>
    %70 = tpu.concatenate %69, %65 in 0 : vector<16x8xf32>, vector<240x8xf32> -> vector<256x8xf32>
    %71 = arith.addf %62, %70 : vector<256x8xf32>
    %72 = tpu.concatenate %68, %69 in 0 : vector<240x8xf32>, vector<16x8xf32> -> vector<256x8xf32>
    %73 = arith.addf %71, %72 : vector<256x8xf32>
    %74 = arith.index_cast %arg1 : i32 to index
    %c0_25 = arith.constant 0 : index
    %c0_26 = arith.constant 0 : index
    %75 = vector.load %arg7[%74, %c0_25, %c0_26] : memref<2x1x8xf32, #tpu.memory_space<vmem>>, vector<1x1x8xf32>
    %76 = vector.shape_cast %75 : vector<1x1x8xf32> to vector<1x8xf32>
    %77 = vector.broadcast %76 : vector<1x8xf32> to vector<256x8xf32>
    %78 = arith.mulf %73, %77 : vector<256x8xf32>
    %79 = arith.index_cast %arg1 : i32 to index
    %c0_27 = arith.constant 0 : index
    %c0_28 = arith.constant 0 : index
    %80 = vector.load %arg8[%79, %c0_27, %c0_28] : memref<2x1x8xf32, #tpu.memory_space<vmem>>, vector<1x1x8xf32>
    %81 = vector.shape_cast %80 : vector<1x1x8xf32> to vector<1x8xf32>
    %82 = vector.broadcast %81 : vector<1x8xf32> to vector<256x8xf32>
    %83 = arith.addf %78, %82 : vector<256x8xf32>
    %cst_29 = arith.constant 0.000000e+00 : f32
    %84 = vector.broadcast %cst_29 : f32 to vector<256x8xf32>
    %85 = arith.cmpf ogt, %83, %84 : vector<256x8xf32>
    %cst_30 = arith.constant 1.000000e-01 : f32
    %86 = vector.broadcast %cst_30 : f32 to vector<256x8xf32>
    %87 = arith.mulf %86, %83 : vector<256x8xf32>
    %88 = arith.select %85, %83, %87 : vector<256x8xi1>, vector<256x8xf32>
    %89 = arith.addf %4, %88 : vector<256x8xf32>
    %c0_31 = arith.constant 0 : index
    %c0_32 = arith.constant 0 : index
    %c0_33 = arith.constant 0 : index
    %90 = vector.load %arg9[%c0_31, %c0_32, %c0_33] : memref<1x256x8xf32, #tpu.memory_space<vmem>>, vector<1x256x8xf32>
    %91 = vector.shape_cast %90 : vector<1x256x8xf32> to vector<256x8xf32>
    %92 = vector.shape_cast %89 : vector<256x8xf32> to vector<1x256x8xf32>
    tpu.vector_store %arg9[%c0_31, %c0_32, %c0_33], %92 {strides = array<i32>} : memref<1x256x8xf32, #tpu.memory_space<vmem>>, vector<1x256x8xf32>,
    return
  }
  func.func @transform_0(%arg0: i32, %arg1: i32) -> (i32, i32, i32) {
    %c0_i32 = arith.constant 0 : i32
    %c0_i32_0 = arith.constant 0 : i32
    %c0_i32_1 = arith.constant 0 : i32
    return %arg0, %c0_i32, %c0_i32_0 : i32, i32, i32
  }
  func.func @transform_1(%arg0: i32, %arg1: i32) -> (i32, i32, i32) {
    %c0_i32 = arith.constant 0 : i32
    %c0_i32_0 = arith.constant 0 : i32
    %c0_i32_1 = arith.constant 0 : i32
    %c0_i32_2 = arith.constant 0 : i32
    return %c0_i32, %c0_i32_0, %c0_i32_1 : i32, i32, i32
  }
  func.func @transform_2(%arg0: i32, %arg1: i32) -> (i32, i32, i32) {
    %c0_i32 = arith.constant 0 : i32
    %c0_i32_0 = arith.constant 0 : i32
    %c0_i32_1 = arith.constant 0 : i32
    %c0_i32_2 = arith.constant 0 : i32
    return %c0_i32, %c0_i32_0, %c0_i32_1 : i32, i32, i32
  }
  func.func @transform_3(%arg0: i32, %arg1: i32) -> (i32, i32, i32) {
    %c0_i32 = arith.constant 0 : i32
    %c0_i32_0 = arith.constant 0 : i32
    %c0_i32_1 = arith.constant 0 : i32
    %c0_i32_2 = arith.constant 0 : i32
    return %c0_i32, %c0_i32_0, %c0_i32_1 : i32, i32, i32
  }
  func.func @transform_4(%arg0: i32, %arg1: i32) -> (i32, i32, i32) {
    %c0_i32 = arith.constant 0 : i32
    %c0_i32_0 = arith.constant 0 : i32
    %c0_i32_1 = arith.constant 0 : i32
    %c0_i32_2 = arith.constant 0 : i32
    return %c0_i32, %c0_i32_0, %c0_i32_1 : i32, i32, i32
  }
  func.func @transform_5(%arg0: i32, %arg1: i32) -> (i32, i32, i32) {
    %c0_i32 = arith.constant 0 : i32
    %c0_i32_0 = arith.constant 0 : i32
    %c0_i32_1 = arith.constant 0 : i32
    %c0_i32_2 = arith.constant 0 : i32
    return %c0_i32, %c0_i32_0, %c0_i32_1 : i32, i32, i32
  }
  func.func @transform_6(%arg0: i32, %arg1: i32) -> (i32, i32, i32) {
    %c0_i32 = arith.constant 0 : i32
    %c0_i32_0 = arith.constant 0 : i32
    %c0_i32_1 = arith.constant 0 : i32
    %c0_i32_2 = arith.constant 0 : i32
    return %c0_i32, %c0_i32_0, %c0_i32_1 : i32, i32, i32
  }
  func.func @transform_7(%arg0: i32, %arg1: i32) -> (i32, i32, i32) {
    %c0_i32 = arith.constant 0 : i32
    %c0_i32_0 = arith.constant 0 : i32
    %c0_i32_1 = arith.constant 0 : i32
    return %arg0, %c0_i32, %c0_i32_0 : i32, i32, i32
  }
}

</mosaic_0001>

<llo_original>
// kernel: tpu_custom_call.1
$region0: #{tpu_custom_call.1}
  #allocation0 [shape = 'u32[]', space=smem, size = 0x4, offset = 0x4, fixed_abs, tag = 'smem constant byte address 0x4 - core index']
  #allocation1 [shape = 'u32[144,128]{1,0:T(1,128)}', space=vmem, size = 0x12000, scoped, tag = 'internal scratch']
  %s0 = inlined_call_operand.vmem [shape: f32[2,256,8], index: 0, kind: input, shape index: {}]
  %s1 = inlined_call_operand.vmem [shape: bf16[2,8,4], index: 1, kind: input, shape index: {}]
  %s2 = inlined_call_operand.vmem [shape: f32[2,1,4], index: 2, kind: input, shape index: {}]
  %s3 = inlined_call_operand.vmem [shape: f32[2,1,4], index: 3, kind: input, shape index: {}]
  %s4 = inlined_call_operand.vmem [shape: bf16[2,36,8], index: 4, kind: input, shape index: {}]
  %s5 = inlined_call_operand.vmem [shape: f32[2,1,8], index: 5, kind: input, shape index: {}]
  %s6 = inlined_call_operand.vmem [shape: f32[2,1,8], index: 6, kind: input, shape index: {}]
  %s7 = inlined_call_operand.vmem [shape: f32[2,256,8], index: 7, kind: output, shape index: {}]
  %s8 = sld [smem:[#allocation0]]
  $region65: #{tpu_custom_call.1} parent=0
    _
  %s10 = ssub.s32 1, %s8
  %s11 = scalar_select 0, %s10, %s8
  loop: start=0, step=1, limit=6
  $region2: #{tpu_custom_call.1} parent=0 // loop_pre_header
    _
  $region3: #{tpu_custom_call.1} parent=0 // loop_header
    %s13 = sphi 0, %s17
    %p14 = scmp.ge.s32.totalorder %s13, 6
    %s20 = sphi 0, %s32
    %s21 = sphi 0, %s28
    %s22 = sphi 0, %s20
    %s23 = sphi 0, %s21
    %s24 = sphi 0, %s22
    %s25 = sphi 0, %s23
    %s35 = sphi 0, %s37
    %s38 = sphi 0, %s35
    %s39 = sphi 0, %s38
    %s55 = sphi 0, %s39
    %s59 = sphi 0, %s59
    %s61 = sphi 0, %s59
    %s62 = sphi 0, %s61
    %s76 = sphi 0, %s62
    %s80 = sphi 0, %s80
    %s82 = sphi 0, %s80
    %s83 = sphi 0, %s82
    %s97 = sphi 0, %s83
    %s101 = sphi 0, %s101
    %s103 = sphi 0, %s101
    %s104 = sphi 0, %s103
    %s118 = sphi 0, %s104
    %s122 = sphi 0, %s122
    %s124 = sphi 0, %s122
    %s125 = sphi 0, %s124
    %s139 = sphi 0, %s125
    %s143 = sphi 0, %s143
    %s145 = sphi 0, %s143
    %s146 = sphi 0, %s145
    %s160 = sphi 0, %s146
    %s164 = sphi 0, %s164
    %s166 = sphi 0, %s164
    %s167 = sphi 0, %s166
    %s181 = sphi 0, %s167
    %s187 = sphi 0, %s189
    %s190 = sphi 0, %s187
    %s191 = sphi 0, %s190
    %s207 = sphi 0, %s191
  $region4: #{tpu_custom_call.1} parent=0 // loop_header_branch
    %16 = sbr.rel (%p14) target = $region8
  $region5: #{tpu_custom_call.1} parent=0 // loop_body
    %s18 = ssub.s32 %s13, 1
    %s19 = ssub.s32 %s13, 2
    %s26 = sadd.s32 1, %s21
    %p27 = scmp.ge.s32.totalorder %s26, 2
    %s28 = scalar_select %p27, 0, %s26
    %s29 = sadd.s32 1, %s20
    %s30 = scalar_select %p27, %s29, %s20
    %p31 = scmp.ge.s32.totalorder %s30, 2
    %s32 = scalar_select %p31, 0, %s30
    %s33 = ssub.s32 %s20, %s32
    %p34 = scmp.eq.s32.totalorder %s33, 0
    %s36 = sadd.s32 %s35, 1
    %s37 = scalar_select %p34, %s35, %s36
    %p40 = pneg %p34
    %p41 = scmp.eq.s32.totalorder %s13, 3
    %p42 = por %p40, %p41
    %p43 = scmp.ne.s32.totalorder %s35, %s38
    %p44 = scmp.eq.s32.totalorder %s13, 0
    %p45 = por %p43, %p44
    %p46 = scmp.ne.s32.totalorder %s35, %s38
    %p47 = scmp.eq.s32.totalorder %s18, 3
    %p48 = por %p46, %p47
    %p49 = scmp.ne.s32.totalorder %s38, %s39
    %p50 = scmp.eq.s32.totalorder %s18, 0
    %p51 = por %p49, %p50
    %p52 = scmp.ne.s32.totalorder %s38, %s39
    %p53 = scmp.eq.s32.totalorder %s19, 3
    %p54 = por %p52, %p53
    %p56 = scmp.ne.s32.totalorder %s39, %s55
    %p57 = scmp.eq.s32.totalorder %s19, 0
    %p58 = por %p56, %p57
    %s60 = sadd.s32 %s59, 1
    %p63 = scmp.eq.s32.totalorder %s13, 3
    %p64 = scmp.ne.s32.totalorder %s59, %s61
    %p65 = scmp.eq.s32.totalorder %s13, 0
    %p66 = por %p64, %p65
    %p67 = scmp.ne.s32.totalorder %s59, %s61
    %p68 = scmp.eq.s32.totalorder %s18, 3
    %p69 = por %p67, %p68
    %p70 = scmp.ne.s32.totalorder %s61, %s62
    %p71 = scmp.eq.s32.totalorder %s18, 0
    %p72 = por %p70, %p71
    %p73 = scmp.ne.s32.totalorder %s61, %s62
    %p74 = scmp.eq.s32.totalorder %s19, 3
    %p75 = por %p73, %p74
    %p77 = scmp.ne.s32.totalorder %s62, %s76
    %p78 = scmp.eq.s32.totalorder %s19, 0
    %p79 = por %p77, %p78
    %s81 = sadd.s32 %s80, 1
    %p84 = scmp.eq.s32.totalorder %s13, 3
    %p85 = scmp.ne.s32.totalorder %s80, %s82
    %p86 = scmp.eq.s32.totalorder %s13, 0
    %p87 = por %p85, %p86
    %p88 = scmp.ne.s32.totalorder %s80, %s82
    %p89 = scmp.eq.s32.totalorder %s18, 3
    %p90 = por %p88, %p89
    %p91 = scmp.ne.s32.totalorder %s82, %s83
    %p92 = scmp.eq.s32.totalorder %s18, 0
    %p93 = por %p91, %p92
    %p94 = scmp.ne.s32.totalorder %s82, %s83
    %p95 = scmp.eq.s32.totalorder %s19, 3
    %p96 = por %p94, %p95
    %p98 = scmp.ne.s32.totalorder %s83, %s97
    %p99 = scmp.eq.s32.totalorder %s19, 0
    %p100 = por %p98, %p99
    %s102 = sadd.s32 %s101, 1
    %p105 = scmp.eq.s32.totalorder %s13, 3
    %p106 = scmp.ne.s32.totalorder %s101, %s103
    %p107 = scmp.eq.s32.totalorder %s13, 0
    %p108 = por %p106, %p107
    %p109 = scmp.ne.s32.totalorder %s101, %s103
    %p110 = scmp.eq.s32.totalorder %s18, 3
    %p111 = por %p109, %p110
    %p112 = scmp.ne.s32.totalorder %s103, %s104
    %p113 = scmp.eq.s32.totalorder %s18, 0
    %p114 = por %p112, %p113
    %p115 = scmp.ne.s32.totalorder %s103, %s104
    %p116 = scmp.eq.s32.totalorder %s19, 3
    %p117 = por %p115, %p116
    %p119 = scmp.ne.s32.totalorder %s104, %s118
    %p120 = scmp.eq.s32.totalorder %s19, 0
    %p121 = por %p119, %p120
    %s123 = sadd.s32 %s122, 1
    %p126 = scmp.eq.s32.totalorder %s13, 3
    %p127 = scmp.ne.s32.totalorder %s122, %s124
    %p128 = scmp.eq.s32.totalorder %s13, 0
    %p129 = por %p127, %p128
    %p130 = scmp.ne.s32.totalorder %s122, %s124
    %p131 = scmp.eq.s32.totalorder %s18, 3
    %p132 = por %p130, %p131
    %p133 = scmp.ne.s32.totalorder %s124, %s125
    %p134 = scmp.eq.s32.totalorder %s18, 0
    %p135 = por %p133, %p134
    %p136 = scmp.ne.s32.totalorder %s124, %s125
    %p137 = scmp.eq.s32.totalorder %s19, 3
    %p138 = por %p136, %p137
    %p140 = scmp.ne.s32.totalorder %s125, %s139
    %p141 = scmp.eq.s32.totalorder %s19, 0
    %p142 = por %p140, %p141
    %s144 = sadd.s32 %s143, 1
    %p147 = scmp.eq.s32.totalorder %s13, 3
    %p148 = scmp.ne.s32.totalorder %s143, %s145
    %p149 = scmp.eq.s32.totalorder %s13, 0
    %p150 = por %p148, %p149
    %p151 = scmp.ne.s32.totalorder %s143, %s145
    %p152 = scmp.eq.s32.totalorder %s18, 3
    %p153 = por %p151, %p152
    %p154 = scmp.ne.s32.totalorder %s145, %s146
    %p155 = scmp.eq.s32.totalorder %s18, 0
    %p156 = por %p154, %p155
    %p157 = scmp.ne.s32.totalorder %s145, %s146
    %p158 = scmp.eq.s32.totalorder %s19, 3
    %p159 = por %p157, %p158
    %p161 = scmp.ne.s32.totalorder %s146, %s160
    %p162 = scmp.eq.s32.totalorder %s19, 0
    %p163 = por %p161, %p162
    %s165 = sadd.s32 %s164, 1
    %p168 = scmp.eq.s32.totalorder %s13, 3
    %p169 = scmp.ne.s32.totalorder %s164, %s166
    %p170 = scmp.eq.s32.totalorder %s13, 0
    %p171 = por %p169, %p170
    %p172 = scmp.ne.s32.totalorder %s164, %s166
    %p173 = scmp.eq.s32.totalorder %s18, 3
    %p174 = por %p172, %p173
    %p175 = scmp.ne.s32.totalorder %s166, %s167
    %p176 = scmp.eq.s32.totalorder %s18, 0
    %p177 = por %p175, %p176
    %p178 = scmp.ne.s32.totalorder %s166, %s167
    %p179 = scmp.eq.s32.totalorder %s19, 3
    %p180 = por %p178, %p179
    %p182 = scmp.ne.s32.totalorder %s167, %s181
    %p183 = scmp.eq.s32.totalorder %s19, 0
    %p184 = por %p182, %p183
    %s185 = ssub.s32 %s20, %s32
    %p186 = scmp.eq.s32.totalorder %s185, 0
    %s188 = sadd.s32 %s187, 1
    %s189 = scalar_select %p186, %s187, %s188
    %p192 = pneg %p186
    %p193 = scmp.eq.s32.totalorder %s13, 3
    %p194 = por %p192, %p193
    %p195 = scmp.ne.s32.totalorder %s187, %s190
    %p196 = scmp.eq.s32.totalorder %s13, 0
    %p197 = por %p195, %p196
    %p198 = scmp.ne.s32.totalorder %s187, %s190
    %p199 = scmp.eq.s32.totalorder %s18, 3
    %p200 = por %p198, %p199
    %p201 = scmp.ne.s32.totalorder %s190, %s191
    %p202 = scmp.eq.s32.totalorder %s18, 0
    %p203 = por %p201, %p202
    %p204 = scmp.ne.s32.totalorder %s190, %s191
    %p205 = scmp.eq.s32.totalorder %s19, 3
    %p206 = por %p204, %p205
    %p208 = scmp.ne.s32.totalorder %s191, %s207
    %p209 = scmp.eq.s32.totalorder %s19, 0
    %p210 = por %p208, %p209
    %p211 = scmp.le.s32.totalorder 1, %s13
    %p212 = scmp.lt.s32.totalorder %s13, 5
    %p213 = pnand %p211, %p212
    %p214 = pneg %p213
    // Predicated region
    $region9: #{tpu_custom_call.1} parent=5 // pred_check
      _
    $region10: #{tpu_custom_call.1} parent=5 // pred_check_branch
      %216 = sbr.rel (%p213) target = $region12
    $region11: #{tpu_custom_call.1} parent=5 // pred_region
      %s217 = ssub.s32 %s13, 1
      // Predicated region
      $region13: #{tpu_custom_call.1} parent=11 // pred_check
        %p218 = pneg %p72
      $region14: #{tpu_custom_call.1} parent=11 // pred_check_branch
        %220 = sbr.rel (%p218) target = $region16
      $region15: #{tpu_custom_call.1} parent=11 // pred_region
        _
      $region16: #{tpu_custom_call.1} parent=11 // pred_fallthru
        _
      // Predicated region
      $region17: #{tpu_custom_call.1} parent=11 // pred_check
        %p221 = pneg %p93
      $region18: #{tpu_custom_call.1} parent=11 // pred_check_branch
        %223 = sbr.rel (%p221) target = $region20
      $region19: #{tpu_custom_call.1} parent=11 // pred_region
        _
      $region20: #{tpu_custom_call.1} parent=11 // pred_fallthru
        _
      // Predicated region
      $region21: #{tpu_custom_call.1} parent=11 // pred_check
        %p224 = pneg %p114
      $region22: #{tpu_custom_call.1} parent=11 // pred_check_branch
        %226 = sbr.rel (%p224) target = $region24
      $region23: #{tpu_custom_call.1} parent=11 // pred_region
        _
      $region24: #{tpu_custom_call.1} parent=11 // pred_fallthru
        _
      // Predicated region
      $region25: #{tpu_custom_call.1} parent=11 // pred_check
        %p227 = pneg %p135
      $region26: #{tpu_custom_call.1} parent=11 // pred_check_branch
        %229 = sbr.rel (%p227) target = $region28
      $region27: #{tpu_custom_call.1} parent=11 // pred_region
        _
      $region28: #{tpu_custom_call.1} parent=11 // pred_fallthru
        _
      // Predicated region
      $region29: #{tpu_custom_call.1} parent=11 // pred_check
        %p230 = pneg %p156
      $region30: #{tpu_custom_call.1} parent=11 // pred_check_branch
        %232 = sbr.rel (%p230) target = $region32
      $region31: #{tpu_custom_call.1} parent=11 // pred_region
        _
      $region32: #{tpu_custom_call.1} parent=11 // pred_fallthru
        _
      // Predicated region
      $region33: #{tpu_custom_call.1} parent=11 // pred_check
        %p233 = pneg %p177
      $region34: #{tpu_custom_call.1} parent=11 // pred_check_branch
        %235 = sbr.rel (%p233) target = $region36
      $region35: #{tpu_custom_call.1} parent=11 // pred_region
        _
      $region36: #{tpu_custom_call.1} parent=11 // pred_fallthru
        _
    $region12: #{tpu_custom_call.1} parent=5 // pred_fallthru
      _
    %p236 = scmp.lt.s32.totalorder %s13, 4
    // Predicated region
    $region37: #{tpu_custom_call.1} parent=5 // pred_check
      %p237 = pneg %p236
    $region38: #{tpu_custom_call.1} parent=5 // pred_check_branch
      %239 = sbr.rel (%p237) target = $region40
    $region39: #{tpu_custom_call.1} parent=5 // pred_region
      // Predicated region
      $region41: #{tpu_custom_call.1} parent=39 // pred_check
        %p240 = pneg %p45
      $region42: #{tpu_custom_call.1} parent=39 // pred_check_branch
        %242 = sbr.rel (%p240) target = $region44
      $region43: #{tpu_custom_call.1} parent=39 // pred_region
        %p243 = scmp.lt.s32.totalorder %s20, 1
        %s244 = scalar_select %p243, %s20, 1
        %s245 = smul.addr %s244, 32
        %s246 = smul.addr %s245, 8
        %s247 = scalar_lea.vmem %s0, %s246
      $region44: #{tpu_custom_call.1} parent=39 // pred_fallthru
        _
    $region40: #{tpu_custom_call.1} parent=5 // pred_fallthru
      _
    %p248 = scmp.le.s32.totalorder 1, %s13
    %p249 = scmp.lt.s32.totalorder %s13, 5
    %p250 = pnand %p248, %p249
    %p251 = pneg %p250
    // Predicated region
    $region45: #{tpu_custom_call.1} parent=5 // pred_check
      _
    $region46: #{tpu_custom_call.1} parent=5 // pred_check_branch
      %253 = sbr.rel (%p250) target = $region48
    $region47: #{tpu_custom_call.1} parent=5 // pred_region
      %s254 = ssub.s32 %s13, 1
      %p255 = scmp.lt.s32.totalorder %s22, 1
      %s256 = scalar_select %p255, %s22, 1
      %s257 = smul.addr %s256, 32
      %s258 = smul.addr %s257, 8
      %s259 = scalar_lea.vmem %s0, %s258
      %p260 = pneg %p51
      %p261 = pneg %p48
      %p262 = pneg %p72
      %p263 = pneg %p69
      %p264 = pneg %p93
      %p265 = pneg %p90
      %p266 = pneg %p114
      %p267 = pneg %p111
      %p268 = pneg %p135
      %p269 = pneg %p132
      %p270 = pneg %p156
      %p271 = pneg %p153
      %p272 = pneg %p177
      %p273 = pneg %p174
      %p274 = pneg %p203
      %p275 = pneg %p200
      %p276 = scmp.lt.s32.totalorder %s22, 1
      %s277 = scalar_select %p276, %s22, 1
      %s278 = smul.addr %s277, 32
      %s279 = smul.addr %s278, 8
      %s280 = scalar_lea.vmem %s7, %s279
      %p281 = scmp.lt.s32.totalorder %s22, 1
      %s282 = scalar_select %p281, %s22, 1
      %s283 = smul.addr %s282, 32
      %s284 = smul.addr %s283, 8
      %s285 = scalar_lea.vmem %s0, %s284
      %p286 = scmp.lt.s32.totalorder %s22, 1
      %s287 = scalar_select %p286, %s22, 1
      %s288 = smul.addr %s287, 32
      %s289 = smul.addr %s288, 8
      %s290 = scalar_lea.vmem %s7, %s289
      %p292 = scmp.eq.s32.totalorder %s23, 0
      // Predicated region
      $region49: #{tpu_custom_call.1} parent=47 // pred_check
        %p293 = pneg %p292
      $region50: #{tpu_custom_call.1} parent=47 // pred_check_branch
        %295 = sbr.rel (%p293) target = $region52
      $region51: #{tpu_custom_call.1} parent=47 // pred_region
        %v296 = vld [vmem:[%s285] sm:$0xff]
        %v297 = vld [vmem:[%s285 + $0x8] sm:$0xff]
        %v298 = vld [vmem:[%s285 + $0x10] sm:$0xff]
        %v299 = vld [vmem:[%s285 + $0x18] sm:$0xff]
        %v300 = vld [vmem:[%s285 + $0x20] sm:$0xff]
        %v301 = vld [vmem:[%s285 + $0x28] sm:$0xff]
        %v302 = vld [vmem:[%s285 + $0x30] sm:$0xff]
        %v303 = vld [vmem:[%s285 + $0x38] sm:$0xff]
        %v304 = vld [vmem:[%s285 + $0x40] sm:$0xff]
        %v305 = vld [vmem:[%s285 + $0x48] sm:$0xff]
        %v306 = vld [vmem:[%s285 + $0x50] sm:$0xff]
        %v307 = vld [vmem:[%s285 + $0x58] sm:$0xff]
        %v308 = vld [vmem:[%s285 + $0x60] sm:$0xff]
        %v309 = vld [vmem:[%s285 + $0x68] sm:$0xff]
        %v310 = vld [vmem:[%s285 + $0x70] sm:$0xff]
        %v311 = vld [vmem:[%s285 + $0x78] sm:$0xff]
        %v312 = vld [vmem:[%s285 + $0x80] sm:$0xff]
        %v313 = vld [vmem:[%s285 + $0x88] sm:$0xff]
        %v314 = vld [vmem:[%s285 + $0x90] sm:$0xff]
        %v315 = vld [vmem:[%s285 + $0x98] sm:$0xff]
        %v316 = vld [vmem:[%s285 + $0xa0] sm:$0xff]
        %v317 = vld [vmem:[%s285 + $0xa8] sm:$0xff]
        %v318 = vld [vmem:[%s285 + $0xb0] sm:$0xff]
        %v319 = vld [vmem:[%s285 + $0xb8] sm:$0xff]
        %v320 = vld [vmem:[%s285 + $0xc0] sm:$0xff]
        %v321 = vld [vmem:[%s285 + $0xc8] sm:$0xff]
        %v322 = vld [vmem:[%s285 + $0xd0] sm:$0xff]
        %v323 = vld [vmem:[%s285 + $0xd8] sm:$0xff]
        %v324 = vld [vmem:[%s285 + $0xe0] sm:$0xff]
        %v325 = vld [vmem:[%s285 + $0xe8] sm:$0xff]
        %v326 = vld [vmem:[%s285 + $0xf0] sm:$0xff]
        %v327 = vld [vmem:[%s285 + $0xf8] sm:$0xff]
        %vm328 = vcmask 64512
        %329 = vst.msk [vmem:[%s290] sm:$0xff] %vm328, %v296
        %330 = vst.msk [vmem:[%s290 + $0x8] sm:$0xff] %vm328, %v297
        %331 = vst.msk [vmem:[%s290 + $0x10] sm:$0xff] %vm328, %v298
        %332 = vst.msk [vmem:[%s290 + $0x18] sm:$0xff] %vm328, %v299
        %333 = vst.msk [vmem:[%s290 + $0x20] sm:$0xff] %vm328, %v300
        %334 = vst.msk [vmem:[%s290 + $0x28] sm:$0xff] %vm328, %v301
        %335 = vst.msk [vmem:[%s290 + $0x30] sm:$0xff] %vm328, %v302
        %336 = vst.msk [vmem:[%s290 + $0x38] sm:$0xff] %vm328, %v303
        %337 = vst.msk [vmem:[%s290 + $0x40] sm:$0xff] %vm328, %v304
        %338 = vst.msk [vmem:[%s290 + $0x48] sm:$0xff] %vm328, %v305
        %339 = vst.msk [vmem:[%s290 + $0x50] sm:$0xff] %vm328, %v306
        %340 = vst.msk [vmem:[%s290 + $0x58] sm:$0xff] %vm328, %v307
        %341 = vst.msk [vmem:[%s290 + $0x60] sm:$0xff] %vm328, %v308
        %342 = vst.msk [vmem:[%s290 + $0x68] sm:$0xff] %vm328, %v309
        %343 = vst.msk [vmem:[%s290 + $0x70] sm:$0xff] %vm328, %v310
        %344 = vst.msk [vmem:[%s290 + $0x78] sm:$0xff] %vm328, %v311
        %345 = vst.msk [vmem:[%s290 + $0x80] sm:$0xff] %vm328, %v312
        %346 = vst.msk [vmem:[%s290 + $0x88] sm:$0xff] %vm328, %v313
        %347 = vst.msk [vmem:[%s290 + $0x90] sm:$0xff] %vm328, %v314
        %348 = vst.msk [vmem:[%s290 + $0x98] sm:$0xff] %vm328, %v315
        %349 = vst.msk [vmem:[%s290 + $0xa0] sm:$0xff] %vm328, %v316
        %350 = vst.msk [vmem:[%s290 + $0xa8] sm:$0xff] %vm328, %v317
        %351 = vst.msk [vmem:[%s290 + $0xb0] sm:$0xff] %vm328, %v318
        %352 = vst.msk [vmem:[%s290 + $0xb8] sm:$0xff] %vm328, %v319
        %353 = vst.msk [vmem:[%s290 + $0xc0] sm:$0xff] %vm328, %v320
        %354 = vst.msk [vmem:[%s290 + $0xc8] sm:$0xff] %vm328, %v321
        %355 = vst.msk [vmem:[%s290 + $0xd0] sm:$0xff] %vm328, %v322
        %356 = vst.msk [vmem:[%s290 + $0xd8] sm:$0xff] %vm328, %v323
        %357 = vst.msk [vmem:[%s290 + $0xe0] sm:$0xff] %vm328, %v324
        %358 = vst.msk [vmem:[%s290 + $0xe8] sm:$0xff] %vm328, %v325
        %359 = vst.msk [vmem:[%s290 + $0xf0] sm:$0xff] %vm328, %v326
        %360 = vst.msk [vmem:[%s290 + $0xf8] sm:$0xff] %vm328, %v327
      $region52: #{tpu_custom_call.1} parent=47 // pred_fallthru
        _
      %v361 = vld [vmem:[%s290] sm:$0xff]
      %v362 = vld [vmem:[%s290 + $0x8] sm:$0xff]
      %v363 = vld [vmem:[%s290 + $0x10] sm:$0xff]
      %v364 = vld [vmem:[%s290 + $0x18] sm:$0xff]
      %v365 = vld [vmem:[%s290 + $0x20] sm:$0xff]
      %v366 = vld [vmem:[%s290 + $0x28] sm:$0xff]
      %v367 = vld [vmem:[%s290 + $0x30] sm:$0xff]
      %v368 = vld [vmem:[%s290 + $0x38] sm:$0xff]
      %v369 = vld [vmem:[%s290 + $0x40] sm:$0xff]
      %v370 = vld [vmem:[%s290 + $0x48] sm:$0xff]
      %v371 = vld [vmem:[%s290 + $0x50] sm:$0xff]
      %v372 = vld [vmem:[%s290 + $0x58] sm:$0xff]
      %v373 = vld [vmem:[%s290 + $0x60] sm:$0xff]
      %v374 = vld [vmem:[%s290 + $0x68] sm:$0xff]
      %v375 = vld [vmem:[%s290 + $0x70] sm:$0xff]
      %v376 = vld [vmem:[%s290 + $0x78] sm:$0xff]
      %v377 = vld [vmem:[%s290 + $0x80] sm:$0xff]
      %v378 = vld [vmem:[%s290 + $0x88] sm:$0xff]
      %v379 = vld [vmem:[%s290 + $0x90] sm:$0xff]
      %v380 = vld [vmem:[%s290 + $0x98] sm:$0xff]
      %v381 = vld [vmem:[%s290 + $0xa0] sm:$0xff]
      %v382 = vld [vmem:[%s290 + $0xa8] sm:$0xff]
      %v383 = vld [vmem:[%s290 + $0xb0] sm:$0xff]
      %v384 = vld [vmem:[%s290 + $0xb8] sm:$0xff]
      %v385 = vld [vmem:[%s290 + $0xc0] sm:$0xff]
      %v386 = vld [vmem:[%s290 + $0xc8] sm:$0xff]
      %v387 = vld [vmem:[%s290 + $0xd0] sm:$0xff]
      %v388 = vld [vmem:[%s290 + $0xd8] sm:$0xff]
      %v389 = vld [vmem:[%s290 + $0xe0] sm:$0xff]
      %v390 = vld [vmem:[%s290 + $0xe8] sm:$0xff]
      %v391 = vld [vmem:[%s290 + $0xf0] sm:$0xff]
      %v392 = vld [vmem:[%s290 + $0xf8] sm:$0xff]
      %v393 = vpack.c.bf16 %v362, %v361
      %v394 = vpack.c.bf16 %v364, %v363
      %v395 = vpack.c.bf16 %v366, %v365
      %v396 = vpack.c.bf16 %v368, %v367
      %v397 = vpack.c.bf16 %v370, %v369
      %v398 = vpack.c.bf16 %v372, %v371
      %v399 = vpack.c.bf16 %v374, %v373
      %v400 = vpack.c.bf16 %v376, %v375
      %v401 = vpack.c.bf16 %v378, %v377
      %v402 = vpack.c.bf16 %v380, %v379
      %v403 = vpack.c.bf16 %v382, %v381
      %v404 = vpack.c.bf16 %v384, %v383
      %v405 = vpack.c.bf16 %v386, %v385
      %v406 = vpack.c.bf16 %v388, %v387
      %v407 = vpack.c.bf16 %v390, %v389
      %v408 = vpack.c.bf16 %v392, %v391
      %s409 = smul.addr %s23, 4
      %s410 = scalar_lea.vmem %s1, %s409
      %v411 = vld [vmem:[%s410] sm:$0xf]
      %vm412 = vcmask 64512
      %v414 = vsel %vm412, %v393, 0
      %v417 = vsel %vm412, %v394, 0
      %v420 = vsel %vm412, %v395, 0
      %v423 = vsel %vm412, %v396, 0
      %v426 = vsel %vm412, %v397, 0
      %v429 = vsel %vm412, %v398, 0
      %v432 = vsel %vm412, %v399, 0
      %v435 = vsel %vm412, %v400, 0
      %v438 = vsel %vm412, %v401, 0
      %v441 = vsel %vm412, %v402, 0
      %v444 = vsel %vm412, %v403, 0
      %v447 = vsel %vm412, %v404, 0
      %v450 = vsel %vm412, %v405, 0
      %v453 = vsel %vm412, %v406, 0
      %v456 = vsel %vm412, %v407, 0
      %v459 = vsel %vm412, %v408, 0
      %vm461 = vcmask 1043456
      %v463 = vsel %vm461, %v411, 0
      %465 = vmatprep.subr.bf16.mxu0 0
      %466 = vmatpush1.bf16.msra.mxu0 0
      %467 = vmatprep.subr.bf16.mxu0 0
      %468 = vmatpush1.bf16.msra.mxu0 0
      %469 = vmatprep.subr.bf16.mxu0 0
      %470 = vmatpush1.bf16.msra.mxu0 0
      %471 = vmatprep.subr.bf16.mxu0 0
      %472 = vmatpush1.bf16.msra.mxu0 0
      %473 = vmatprep.subr.bf16.mxu0 0
      %474 = vmatpush1.bf16.msra.mxu0 0
      %475 = vmatprep.subr.bf16.mxu0 0
      %476 = vmatpush1.bf16.msra.mxu0 0
      %477 = vmatprep.subr.bf16.mxu0 0
      %478 = vmatpush1.bf16.msra.mxu0 0
      %479 = vmatprep.subr.bf16.mxu0 0
      %480 = vmatpush1.bf16.msra.mxu0 %v463
      %481 = vmatprep.subr.bf16.mxu0 0
      %482 = vmatpush2.bf16.msra.mxu0 0
      %483 = vmatprep.subr.bf16.mxu0 0
      %484 = vmatpush2.bf16.msra.mxu0 0
      %485 = vmatprep.subr.bf16.mxu0 0
      %486 = vmatpush2.bf16.msra.mxu0 0
      %487 = vmatprep.subr.bf16.mxu0 0
      %488 = vmatpush2.bf16.msra.mxu0 0
      %489 = vmatprep.subr.bf16.mxu0 0
      %490 = vmatpush2.bf16.msra.mxu0 0
      %491 = vmatprep.subr.bf16.mxu0 0
      %492 = vmatpush2.bf16.msra.mxu0 0
      %493 = vmatprep.subr.bf16.mxu0 0
      %494 = vmatpush2.bf16.msra.mxu0 0
      %495 = vmatprep.subr.bf16.mxu0 0
      %496 = vmatpush2.bf16.msra.mxu0 0
      %497 = vmatprep.mubr.bf16.mxu0 0
      %498 = vmatmul.mubr.bf16.gmra.mxu0 %v414
      %v499 = vpop.f32.mrf.mxu0
      %v500 = vadd.f32 0.0, %v499
      %v501 = vpop.f32.mrf.mxu0
      %v502 = vpop.f32.mrf.mxu0
      %v503 = vadd.f32 0.0, %v502
      %v504 = vpop.f32.mrf.mxu0
      %505 = vmatprep.mubr.bf16.mxu0 0
      %506 = vmatmul.mubr.bf16.gmra.mxu0 %v417
      %v507 = vpop.f32.mrf.mxu0
      %v508 = vadd.f32 0.0, %v507
      %v509 = vpop.f32.mrf.mxu0
      %v510 = vpop.f32.mrf.mxu0
      %v511 = vadd.f32 0.0, %v510
      %v512 = vpop.f32.mrf.mxu0
      %513 = vmatprep.mubr.bf16.mxu0 0
      %514 = vmatmul.mubr.bf16.gmra.mxu0 %v420
      %v515 = vpop.f32.mrf.mxu0
      %v516 = vadd.f32 0.0, %v515
      %v517 = vpop.f32.mrf.mxu0
      %v518 = vpop.f32.mrf.mxu0
      %v519 = vadd.f32 0.0, %v518
      %v520 = vpop.f32.mrf.mxu0
      %521 = vmatprep.mubr.bf16.mxu0 0
      %522 = vmatmul.mubr.bf16.gmra.mxu0 %v423
      %v523 = vpop.f32.mrf.mxu0
      %v524 = vadd.f32 0.0, %v523
      %v525 = vpop.f32.mrf.mxu0
      %v526 = vpop.f32.mrf.mxu0
      %v527 = vadd.f32 0.0, %v526
      %v528 = vpop.f32.mrf.mxu0
      %529 = vmatprep.mubr.bf16.mxu0 0
      %530 = vmatmul.mubr.bf16.gmra.mxu0 %v426
      %v531 = vpop.f32.mrf.mxu0
      %v532 = vadd.f32 0.0, %v531
      %v533 = vpop.f32.mrf.mxu0
      %v534 = vpop.f32.mrf.mxu0
      %v535 = vadd.f32 0.0, %v534
      %v536 = vpop.f32.mrf.mxu0
      %537 = vmatprep.mubr.bf16.mxu0 0
      %538 = vmatmul.mubr.bf16.gmra.mxu0 %v429
      %v539 = vpop.f32.mrf.mxu0
      %v540 = vadd.f32 0.0, %v539
      %v541 = vpop.f32.mrf.mxu0
      %v542 = vpop.f32.mrf.mxu0
      %v543 = vadd.f32 0.0, %v542
      %v544 = vpop.f32.mrf.mxu0
      %545 = vmatprep.mubr.bf16.mxu0 0
      %546 = vmatmul.mubr.bf16.gmra.mxu0 %v432
      %v547 = vpop.f32.mrf.mxu0
      %v548 = vadd.f32 0.0, %v547
      %v549 = vpop.f32.mrf.mxu0
      %v550 = vpop.f32.mrf.mxu0
      %v551 = vadd.f32 0.0, %v550
      %v552 = vpop.f32.mrf.mxu0
      %553 = vmatprep.mubr.bf16.mxu0 0
      %554 = vmatmul.mubr.bf16.gmra.mxu0 %v435
      %v555 = vpop.f32.mrf.mxu0
      %v556 = vadd.f32 0.0, %v555
      %v557 = vpop.f32.mrf.mxu0
      %v558 = vpop.f32.mrf.mxu0
      %v559 = vadd.f32 0.0, %v558
      %v560 = vpop.f32.mrf.mxu0
      %561 = vmatprep.mubr.bf16.mxu0 0
      %562 = vmatmul.mubr.bf16.gmra.mxu0 %v438
      %v563 = vpop.f32.mrf.mxu0
      %v564 = vadd.f32 0.0, %v563
      %v565 = vpop.f32.mrf.mxu0
      %v566 = vpop.f32.mrf.mxu0
      %v567 = vadd.f32 0.0, %v566
      %v568 = vpop.f32.mrf.mxu0
      %569 = vmatprep.mubr.bf16.mxu0 0
      %570 = vmatmul.mubr.bf16.gmra.mxu0 %v441
      %v571 = vpop.f32.mrf.mxu0
      %v572 = vadd.f32 0.0, %v571
      %v573 = vpop.f32.mrf.mxu0
      %v574 = vpop.f32.mrf.mxu0
      %v575 = vadd.f32 0.0, %v574
      %v576 = vpop.f32.mrf.mxu0
      %577 = vmatprep.mubr.bf16.mxu0 0
      %578 = vmatmul.mubr.bf16.gmra.mxu0 %v444
      %v579 = vpop.f32.mrf.mxu0
      %v580 = vadd.f32 0.0, %v579
      %v581 = vpop.f32.mrf.mxu0
      %v582 = vpop.f32.mrf.mxu0
      %v583 = vadd.f32 0.0, %v582
      %v584 = vpop.f32.mrf.mxu0
      %585 = vmatprep.mubr.bf16.mxu0 0
      %586 = vmatmul.mubr.bf16.gmra.mxu0 %v447
      %v587 = vpop.f32.mrf.mxu0
      %v588 = vadd.f32 0.0, %v587
      %v589 = vpop.f32.mrf.mxu0
      %v590 = vpop.f32.mrf.mxu0
      %v591 = vadd.f32 0.0, %v590
      %v592 = vpop.f32.mrf.mxu0
      %593 = vmatprep.mubr.bf16.mxu0 0
      %594 = vmatmul.mubr.bf16.gmra.mxu0 %v450
      %v595 = vpop.f32.mrf.mxu0
      %v596 = vadd.f32 0.0, %v595
      %v597 = vpop.f32.mrf.mxu0
      %v598 = vpop.f32.mrf.mxu0
      %v599 = vadd.f32 0.0, %v598
      %v600 = vpop.f32.mrf.mxu0
      %601 = vmatprep.mubr.bf16.mxu0 0
      %602 = vmatmul.mubr.bf16.gmra.mxu0 %v453
      %v603 = vpop.f32.mrf.mxu0
      %v604 = vadd.f32 0.0, %v603
      %v605 = vpop.f32.mrf.mxu0
      %v606 = vpop.f32.mrf.mxu0
      %v607 = vadd.f32 0.0, %v606
      %v608 = vpop.f32.mrf.mxu0
      %609 = vmatprep.mubr.bf16.mxu0 0
      %610 = vmatmul.mubr.bf16.gmra.mxu0 %v456
      %v611 = vpop.f32.mrf.mxu0
      %v612 = vadd.f32 0.0, %v611
      %v613 = vpop.f32.mrf.mxu0
      %v614 = vpop.f32.mrf.mxu0
      %v615 = vadd.f32 0.0, %v614
      %v616 = vpop.f32.mrf.mxu0
      %617 = vmatprep.mubr.bf16.mxu0 0
      %618 = vmatmul.mubr.bf16.gmra.mxu0 %v459
      %v619 = vpop.f32.mrf.mxu0
      %v620 = vadd.f32 0.0, %v619
      %v621 = vpop.f32.mrf.mxu0
      %v622 = vpop.f32.mrf.mxu0
      %v623 = vadd.f32 0.0, %v622
      %v624 = vpop.f32.mrf.mxu0
      %625 = vdwg.mxu0
      %s626 = scalar_lea.vmem %s2, %s23
      %v627 = vld [vmem:[%s626] sm:$0x1]
      %v629 = vlaneseq
      %v630 = vshrl.u32 %v629, 7
      %v631 = vsub.s32 0, %v630
      %v632 = vrot.slane %v627, %v631
      %v634 = vmul.f32 %v500, %v632
      %v635 = vmul.f32 %v503, %v632
      %v636 = vmul.f32 %v508, %v632
      %v637 = vmul.f32 %v511, %v632
      %v638 = vmul.f32 %v516, %v632
      %v639 = vmul.f32 %v519, %v632
      %v640 = vmul.f32 %v524, %v632
      %v641 = vmul.f32 %v527, %v632
      %v642 = vmul.f32 %v532, %v632
      %v643 = vmul.f32 %v535, %v632
      %v644 = vmul.f32 %v540, %v632
      %v645 = vmul.f32 %v543, %v632
      %v646 = vmul.f32 %v548, %v632
      %v647 = vmul.f32 %v551, %v632
      %v648 = vmul.f32 %v556, %v632
      %v649 = vmul.f32 %v559, %v632
      %v650 = vmul.f32 %v564, %v632
      %v651 = vmul.f32 %v567, %v632
      %v652 = vmul.f32 %v572, %v632
      %v653 = vmul.f32 %v575, %v632
      %v654 = vmul.f32 %v580, %v632
      %v655 = vmul.f32 %v583, %v632
      %v656 = vmul.f32 %v588, %v632
      %v657 = vmul.f32 %v591, %v632
      %v658 = vmul.f32 %v596, %v632
      %v659 = vmul.f32 %v599, %v632
      %v660 = vmul.f32 %v604, %v632
      %v661 = vmul.f32 %v607, %v632
      %v662 = vmul.f32 %v612, %v632
      %v663 = vmul.f32 %v615, %v632
      %v664 = vmul.f32 %v620, %v632
      %v665 = vmul.f32 %v623, %v632
      %s666 = scalar_lea.vmem %s3, %s23
      %v667 = vld [vmem:[%s666] sm:$0x1]
      %v669 = vlaneseq
      %v670 = vshrl.u32 %v669, 7
      %v671 = vsub.s32 0, %v670
      %v672 = vrot.slane %v667, %v671
      %v674 = vadd.f32 %v634, %v672
      %v675 = vadd.f32 %v635, %v672
      %v676 = vadd.f32 %v636, %v672
      %v677 = vadd.f32 %v637, %v672
      %v678 = vadd.f32 %v638, %v672
      %v679 = vadd.f32 %v639, %v672
      %v680 = vadd.f32 %v640, %v672
      %v681 = vadd.f32 %v641, %v672
      %v682 = vadd.f32 %v642, %v672
      %v683 = vadd.f32 %v643, %v672
      %v684 = vadd.f32 %v644, %v672
      %v685 = vadd.f32 %v645, %v672
      %v686 = vadd.f32 %v646, %v672
      %v687 = vadd.f32 %v647, %v672
      %v688 = vadd.f32 %v648, %v672
      %v689 = vadd.f32 %v649, %v672
      %v690 = vadd.f32 %v650, %v672
      %v691 = vadd.f32 %v651, %v672
      %v692 = vadd.f32 %v652, %v672
      %v693 = vadd.f32 %v653, %v672
      %v694 = vadd.f32 %v654, %v672
      %v695 = vadd.f32 %v655, %v672
      %v696 = vadd.f32 %v656, %v672
      %v697 = vadd.f32 %v657, %v672
      %v698 = vadd.f32 %v658, %v672
      %v699 = vadd.f32 %v659, %v672
      %v700 = vadd.f32 %v660, %v672
      %v701 = vadd.f32 %v661, %v672
      %v702 = vadd.f32 %v662, %v672
      %v703 = vadd.f32 %v663, %v672
      %v704 = vadd.f32 %v664, %v672
      %v705 = vadd.f32 %v665, %v672
      %vm706 = vcmp.gt.f32.partialorder %v674, 0.0
      %vm707 = vcmp.gt.f32.partialorder %v675, 0.0
      %vm708 = vcmp.gt.f32.partialorder %v676, 0.0
      %vm709 = vcmp.gt.f32.partialorder %v677, 0.0
      %vm710 = vcmp.gt.f32.partialorder %v678, 0.0
      %vm711 = vcmp.gt.f32.partialorder %v679, 0.0
      %vm712 = vcmp.gt.f32.partialorder %v680, 0.0
      %vm713 = vcmp.gt.f32.partialorder %v681, 0.0
      %vm714 = vcmp.gt.f32.partialorder %v682, 0.0
      %vm715 = vcmp.gt.f32.partialorder %v683, 0.0
      %vm716 = vcmp.gt.f32.partialorder %v684, 0.0
      %vm717 = vcmp.gt.f32.partialorder %v685, 0.0
      %vm718 = vcmp.gt.f32.partialorder %v686, 0.0
      %vm719 = vcmp.gt.f32.partialorder %v687, 0.0
      %vm720 = vcmp.gt.f32.partialorder %v688, 0.0
      %vm721 = vcmp.gt.f32.partialorder %v689, 0.0
      %vm722 = vcmp.gt.f32.partialorder %v690, 0.0
      %vm723 = vcmp.gt.f32.partialorder %v691, 0.0
      %vm724 = vcmp.gt.f32.partialorder %v692, 0.0
      %vm725 = vcmp.gt.f32.partialorder %v693, 0.0
      %vm726 = vcmp.gt.f32.partialorder %v694, 0.0
      %vm727 = vcmp.gt.f32.partialorder %v695, 0.0
      %vm728 = vcmp.gt.f32.partialorder %v696, 0.0
      %vm729 = vcmp.gt.f32.partialorder %v697, 0.0
      %vm730 = vcmp.gt.f32.partialorder %v698, 0.0
      %vm731 = vcmp.gt.f32.partialorder %v699, 0.0
      %vm732 = vcmp.gt.f32.partialorder %v700, 0.0
      %vm733 = vcmp.gt.f32.partialorder %v701, 0.0
      %vm734 = vcmp.gt.f32.partialorder %v702, 0.0
      %vm735 = vcmp.gt.f32.partialorder %v703, 0.0
      %vm736 = vcmp.gt.f32.partialorder %v704, 0.0
      %vm737 = vcmp.gt.f32.partialorder %v705, 0.0
      %v738 = vmul.f32 %v674, 0.1
      %v739 = vmul.f32 %v675, 0.1
      %v740 = vmul.f32 %v676, 0.1
      %v741 = vmul.f32 %v677, 0.1
      %v742 = vmul.f32 %v678, 0.1
      %v743 = vmul.f32 %v679, 0.1
      %v744 = vmul.f32 %v680, 0.1
      %v745 = vmul.f32 %v681, 0.1
      %v746 = vmul.f32 %v682, 0.1
      %v747 = vmul.f32 %v683, 0.1
      %v748 = vmul.f32 %v684, 0.1
      %v749 = vmul.f32 %v685, 0.1
      %v750 = vmul.f32 %v686, 0.1
      %v751 = vmul.f32 %v687, 0.1
      %v752 = vmul.f32 %v688, 0.1
      %v753 = vmul.f32 %v689, 0.1
      %v754 = vmul.f32 %v690, 0.1
      %v755 = vmul.f32 %v691, 0.1
      %v756 = vmul.f32 %v692, 0.1
      %v757 = vmul.f32 %v693, 0.1
      %v758 = vmul.f32 %v694, 0.1
      %v759 = vmul.f32 %v695, 0.1
      %v760 = vmul.f32 %v696, 0.1
      %v761 = vmul.f32 %v697, 0.1
      %v762 = vmul.f32 %v698, 0.1
      %v763 = vmul.f32 %v699, 0.1
      %v764 = vmul.f32 %v700, 0.1
      %v765 = vmul.f32 %v701, 0.1
      %v766 = vmul.f32 %v702, 0.1
      %v767 = vmul.f32 %v703, 0.1
      %v768 = vmul.f32 %v704, 0.1
      %v769 = vmul.f32 %v705, 0.1
      %v770 = vsel %vm706, %v674, %v738
      %v771 = vsel %vm707, %v675, %v739
      %v772 = vsel %vm708, %v676, %v740
      %v773 = vsel %vm709, %v677, %v741
      %v774 = vsel %vm710, %v678, %v742
      %v775 = vsel %vm711, %v679, %v743
      %v776 = vsel %vm712, %v680, %v744
      %v777 = vsel %vm713, %v681, %v745
      %v778 = vsel %vm714, %v682, %v746
      %v779 = vsel %vm715, %v683, %v747
      %v780 = vsel %vm716, %v684, %v748
      %v781 = vsel %vm717, %v685, %v749
      %v782 = vsel %vm718, %v686, %v750
      %v783 = vsel %vm719, %v687, %v751
      %v784 = vsel %vm720, %v688, %v752
      %v785 = vsel %vm721, %v689, %v753
      %v786 = vsel %vm722, %v690, %v754
      %v787 = vsel %vm723, %v691, %v755
      %v788 = vsel %vm724, %v692, %v756
      %v789 = vsel %vm725, %v693, %v757
      %v790 = vsel %vm726, %v694, %v758
      %v791 = vsel %vm727, %v695, %v759
      %v792 = vsel %vm728, %v696, %v760
      %v793 = vsel %vm729, %v697, %v761
      %v794 = vsel %vm730, %v698, %v762
      %v795 = vsel %vm731, %v699, %v763
      %v796 = vsel %vm732, %v700, %v764
      %v797 = vsel %vm733, %v701, %v765
      %v798 = vsel %vm734, %v702, %v766
      %v799 = vsel %vm735, %v703, %v767
      %v800 = vsel %vm736, %v704, %v768
      %v801 = vsel %vm737, %v705, %v769
      %v802 = vlaneseq
      %v803 = vshrl.u32 %v802, 7
      %v804 = vadd.s32 %v803, 8
      %v805 = vadd.s32 %v803, 16
      %v806 = vadd.s32 %v803, 24
      %v807 = vadd.s32 %v803, 32
      %v808 = vadd.s32 %v803, 40
      %v809 = vadd.s32 %v803, 48
      %v810 = vadd.s32 %v803, 56
      %v811 = vadd.s32 %v803, 64
      %v812 = vadd.s32 %v803, 72
      %v813 = vadd.s32 %v803, 80
      %v814 = vadd.s32 %v803, 88
      %v815 = vadd.s32 %v803, 96
      %v816 = vadd.s32 %v803, 104
      %v817 = vadd.s32 %v803, 112
      %v818 = vadd.s32 %v803, 120
      %v819 = vadd.s32 %v803, 128
      %v820 = vadd.s32 %v803, 136
      %v821 = vadd.s32 %v803, 144
      %v822 = vadd.s32 %v803, 152
      %v823 = vadd.s32 %v803, 160
      %v824 = vadd.s32 %v803, 168
      %v825 = vadd.s32 %v803, 176
      %v826 = vadd.s32 %v803, 184
      %v827 = vadd.s32 %v803, 192
      %v828 = vadd.s32 %v803, 200
      %v829 = vadd.s32 %v803, 208
      %v830 = vadd.s32 %v803, 216
      %v831 = vadd.s32 %v803, 224
      %v832 = vadd.s32 %v803, 232
      %v833 = vadd.s32 %v803, 240
      %v834 = vadd.s32 %v803, 248
      %vm835 = vcmp.lt.s32.totalorder %v803, 0
      %v836 = vsub.s32 0, %v803
      %v837 = vsel %vm835, %v836, %v803
      %v838 = vshrl.u32 %v837, 4
      %v839 = vand.u32 %v837, 15
      %v840 = vsub.s32 0, %v839
      %v841 = vsel %vm835, %v840, %v839
      %vm842 = vcmp.lt.s32.totalorder %v804, 0
      %v843 = vsub.s32 0, %v804
      %v844 = vsel %vm842, %v843, %v804
      %v845 = vshrl.u32 %v844, 4
      %v846 = vand.u32 %v844, 15
      %v847 = vsub.s32 0, %v846
      %v848 = vsel %vm842, %v847, %v846
      %vm849 = vcmp.lt.s32.totalorder %v805, 0
      %v850 = vsub.s32 0, %v805
      %v851 = vsel %vm849, %v850, %v805
      %v852 = vshrl.u32 %v851, 4
      %v853 = vand.u32 %v851, 15
      %v854 = vsub.s32 0, %v853
      %v855 = vsel %vm849, %v854, %v853
      %vm856 = vcmp.lt.s32.totalorder %v806, 0
      %v857 = vsub.s32 0, %v806
      %v858 = vsel %vm856, %v857, %v806
      %v859 = vshrl.u32 %v858, 4
      %v860 = vand.u32 %v858, 15
      %v861 = vsub.s32 0, %v860
      %v862 = vsel %vm856, %v861, %v860
      %vm863 = vcmp.lt.s32.totalorder %v807, 0
      %v864 = vsub.s32 0, %v807
      %v865 = vsel %vm863, %v864, %v807
      %v866 = vshrl.u32 %v865, 4
      %v867 = vand.u32 %v865, 15
      %v868 = vsub.s32 0, %v867
      %v869 = vsel %vm863, %v868, %v867
      %vm870 = vcmp.lt.s32.totalorder %v808, 0
      %v871 = vsub.s32 0, %v808
      %v872 = vsel %vm870, %v871, %v808
      %v873 = vshrl.u32 %v872, 4
      %v874 = vand.u32 %v872, 15
      %v875 = vsub.s32 0, %v874
      %v876 = vsel %vm870, %v875, %v874
      %vm877 = vcmp.lt.s32.totalorder %v809, 0
      %v878 = vsub.s32 0, %v809
      %v879 = vsel %vm877, %v878, %v809
      %v880 = vshrl.u32 %v879, 4
      %v881 = vand.u32 %v879, 15
      %v882 = vsub.s32 0, %v881
      %v883 = vsel %vm877, %v882, %v881
      %vm884 = vcmp.lt.s32.totalorder %v810, 0
      %v885 = vsub.s32 0, %v810
      %v886 = vsel %vm884, %v885, %v810
      %v887 = vshrl.u32 %v886, 4
      %v888 = vand.u32 %v886, 15
      %v889 = vsub.s32 0, %v888
      %v890 = vsel %vm884, %v889, %v888
      %vm891 = vcmp.lt.s32.totalorder %v811, 0
      %v892 = vsub.s32 0, %v811
      %v893 = vsel %vm891, %v892, %v811
      %v894 = vshrl.u32 %v893, 4
      %v895 = vand.u32 %v893, 15
      %v896 = vsub.s32 0, %v895
      %v897 = vsel %vm891, %v896, %v895
      %vm898 = vcmp.lt.s32.totalorder %v812, 0
      %v899 = vsub.s32 0, %v812
      %v900 = vsel %vm898, %v899, %v812
      %v901 = vshrl.u32 %v900, 4
      %v902 = vand.u32 %v900, 15
      %v903 = vsub.s32 0, %v902
      %v904 = vsel %vm898, %v903, %v902
      %vm905 = vcmp.lt.s32.totalorder %v813, 0
      %v906 = vsub.s32 0, %v813
      %v907 = vsel %vm905, %v906, %v813
      %v908 = vshrl.u32 %v907, 4
      %v909 = vand.u32 %v907, 15
      %v910 = vsub.s32 0, %v909
      %v911 = vsel %vm905, %v910, %v909
      %vm912 = vcmp.lt.s32.totalorder %v814, 0
      %v913 = vsub.s32 0, %v814
      %v914 = vsel %vm912, %v913, %v814
      %v915 = vshrl.u32 %v914, 4
      %v916 = vand.u32 %v914, 15
      %v917 = vsub.s32 0, %v916
      %v918 = vsel %vm912, %v917, %v916
      %vm919 = vcmp.lt.s32.totalorder %v815, 0
      %v920 = vsub.s32 0, %v815
      %v921 = vsel %vm919, %v920, %v815
      %v922 = vshrl.u32 %v921, 4
      %v923 = vand.u32 %v921, 15
      %v924 = vsub.s32 0, %v923
      %v925 = vsel %vm919, %v924, %v923
      %vm926 = vcmp.lt.s32.totalorder %v816, 0
      %v927 = vsub.s32 0, %v816
      %v928 = vsel %vm926, %v927, %v816
      %v929 = vshrl.u32 %v928, 4
      %v930 = vand.u32 %v928, 15
      %v931 = vsub.s32 0, %v930
      %v932 = vsel %vm926, %v931, %v930
      %vm933 = vcmp.lt.s32.totalorder %v817, 0
      %v934 = vsub.s32 0, %v817
      %v935 = vsel %vm933, %v934, %v817
      %v936 = vshrl.u32 %v935, 4
      %v937 = vand.u32 %v935, 15
      %v938 = vsub.s32 0, %v937
      %v939 = vsel %vm933, %v938, %v937
      %vm940 = vcmp.lt.s32.totalorder %v818, 0
      %v941 = vsub.s32 0, %v818
      %v942 = vsel %vm940, %v941, %v818
      %v943 = vshrl.u32 %v942, 4
      %v944 = vand.u32 %v942, 15
      %v945 = vsub.s32 0, %v944
      %v946 = vsel %vm940, %v945, %v944
      %vm947 = vcmp.lt.s32.totalorder %v819, 0
      %v948 = vsub.s32 0, %v819
      %v949 = vsel %vm947, %v948, %v819
      %v950 = vshrl.u32 %v949, 4
      %v951 = vand.u32 %v949, 15
      %v952 = vsub.s32 0, %v951
      %v953 = vsel %vm947, %v952, %v951
      %vm954 = vcmp.lt.s32.totalorder %v820, 0
      %v955 = vsub.s32 0, %v820
      %v956 = vsel %vm954, %v955, %v820
      %v957 = vshrl.u32 %v956, 4
      %v958 = vand.u32 %v956, 15
      %v959 = vsub.s32 0, %v958
      %v960 = vsel %vm954, %v959, %v958
      %vm961 = vcmp.lt.s32.totalorder %v821, 0
      %v962 = vsub.s32 0, %v821
      %v963 = vsel %vm961, %v962, %v821
      %v964 = vshrl.u32 %v963, 4
      %v965 = vand.u32 %v963, 15
      %v966 = vsub.s32 0, %v965
      %v967 = vsel %vm961, %v966, %v965
      %vm968 = vcmp.lt.s32.totalorder %v822, 0
      %v969 = vsub.s32 0, %v822
      %v970 = vsel %vm968, %v969, %v822
      %v971 = vshrl.u32 %v970, 4
      %v972 = vand.u32 %v970, 15
      %v973 = vsub.s32 0, %v972
      %v974 = vsel %vm968, %v973, %v972
      %vm975 = vcmp.lt.s32.totalorder %v823, 0
      %v976 = vsub.s32 0, %v823
      %v977 = vsel %vm975, %v976, %v823
      %v978 = vshrl.u32 %v977, 4
      %v979 = vand.u32 %v977, 15
      %v980 = vsub.s32 0, %v979
      %v981 = vsel %vm975, %v980, %v979
      %vm982 = vcmp.lt.s32.totalorder %v824, 0
      %v983 = vsub.s32 0, %v824
      %v984 = vsel %vm982, %v983, %v824
      %v985 = vshrl.u32 %v984, 4
      %v986 = vand.u32 %v984, 15
      %v987 = vsub.s32 0, %v986
      %v988 = vsel %vm982, %v987, %v986
      %vm989 = vcmp.lt.s32.totalorder %v825, 0
      %v990 = vsub.s32 0, %v825
      %v991 = vsel %vm989, %v990, %v825
      %v992 = vshrl.u32 %v991, 4
      %v993 = vand.u32 %v991, 15
      %v994 = vsub.s32 0, %v993
      %v995 = vsel %vm989, %v994, %v993
      %vm996 = vcmp.lt.s32.totalorder %v826, 0
      %v997 = vsub.s32 0, %v826
      %v998 = vsel %vm996, %v997, %v826
      %v999 = vshrl.u32 %v998, 4
      %v1000 = vand.u32 %v998, 15
      %v1001 = vsub.s32 0, %v1000
      %v1002 = vsel %vm996, %v1001, %v1000
      %vm1003 = vcmp.lt.s32.totalorder %v827, 0
      %v1004 = vsub.s32 0, %v827
      %v1005 = vsel %vm1003, %v1004, %v827
      %v1006 = vshrl.u32 %v1005, 4
      %v1007 = vand.u32 %v1005, 15
      %v1008 = vsub.s32 0, %v1007
      %v1009 = vsel %vm1003, %v1008, %v1007
      %vm1010 = vcmp.lt.s32.totalorder %v828, 0
      %v1011 = vsub.s32 0, %v828
      %v1012 = vsel %vm1010, %v1011, %v828
      %v1013 = vshrl.u32 %v1012, 4
      %v1014 = vand.u32 %v1012, 15
      %v1015 = vsub.s32 0, %v1014
      %v1016 = vsel %vm1010, %v1015, %v1014
      %vm1017 = vcmp.lt.s32.totalorder %v829, 0
      %v1018 = vsub.s32 0, %v829
      %v1019 = vsel %vm1017, %v1018, %v829
      %v1020 = vshrl.u32 %v1019, 4
      %v1021 = vand.u32 %v1019, 15
      %v1022 = vsub.s32 0, %v1021
      %v1023 = vsel %vm1017, %v1022, %v1021
      %vm1024 = vcmp.lt.s32.totalorder %v830, 0
      %v1025 = vsub.s32 0, %v830
      %v1026 = vsel %vm1024, %v1025, %v830
      %v1027 = vshrl.u32 %v1026, 4
      %v1028 = vand.u32 %v1026, 15
      %v1029 = vsub.s32 0, %v1028
      %v1030 = vsel %vm1024, %v1029, %v1028
      %vm1031 = vcmp.lt.s32.totalorder %v831, 0
      %v1032 = vsub.s32 0, %v831
      %v1033 = vsel %vm1031, %v1032, %v831
      %v1034 = vshrl.u32 %v1033, 4
      %v1035 = vand.u32 %v1033, 15
      %v1036 = vsub.s32 0, %v1035
      %v1037 = vsel %vm1031, %v1036, %v1035
      %vm1038 = vcmp.lt.s32.totalorder %v832, 0
      %v1039 = vsub.s32 0, %v832
      %v1040 = vsel %vm1038, %v1039, %v832
      %v1041 = vshrl.u32 %v1040, 4
      %v1042 = vand.u32 %v1040, 15
      %v1043 = vsub.s32 0, %v1042
      %v1044 = vsel %vm1038, %v1043, %v1042
      %vm1045 = vcmp.lt.s32.totalorder %v833, 0
      %v1046 = vsub.s32 0, %v833
      %v1047 = vsel %vm1045, %v1046, %v833
      %v1048 = vshrl.u32 %v1047, 4
      %v1049 = vand.u32 %v1047, 15
      %v1050 = vsub.s32 0, %v1049
      %v1051 = vsel %vm1045, %v1050, %v1049
      %vm1052 = vcmp.lt.s32.totalorder %v834, 0
      %v1053 = vsub.s32 0, %v834
      %v1054 = vsel %vm1052, %v1053, %v834
      %v1055 = vshrl.u32 %v1054, 4
      %v1056 = vand.u32 %v1054, 15
      %v1057 = vsub.s32 0, %v1056
      %v1058 = vsel %vm1052, %v1057, %v1056
      %vm1059 = vcmp.ne.s32.totalorder %v841, 0
      %vm1060 = vcmp.ne.s32.totalorder %v848, 0
      %vm1061 = vcmp.ne.s32.totalorder %v855, 0
      %vm1062 = vcmp.ne.s32.totalorder %v862, 0
      %vm1063 = vcmp.ne.s32.totalorder %v869, 0
      %vm1064 = vcmp.ne.s32.totalorder %v876, 0
      %vm1065 = vcmp.ne.s32.totalorder %v883, 0
      %vm1066 = vcmp.ne.s32.totalorder %v890, 0
      %vm1067 = vcmp.ne.s32.totalorder %v897, 0
      %vm1068 = vcmp.ne.s32.totalorder %v904, 0
      %vm1069 = vcmp.ne.s32.totalorder %v911, 0
      %vm1070 = vcmp.ne.s32.totalorder %v918, 0
      %vm1071 = vcmp.ne.s32.totalorder %v925, 0
      %vm1072 = vcmp.ne.s32.totalorder %v932, 0
      %vm1073 = vcmp.ne.s32.totalorder %v939, 0
      %vm1074 = vcmp.ne.s32.totalorder %v946, 0
      %vm1075 = vcmp.ne.s32.totalorder %v953, 0
      %vm1076 = vcmp.ne.s32.totalorder %v960, 0
      %vm1077 = vcmp.ne.s32.totalorder %v967, 0
      %vm1078 = vcmp.ne.s32.totalorder %v974, 0
      %vm1079 = vcmp.ne.s32.totalorder %v981, 0
      %vm1080 = vcmp.ne.s32.totalorder %v988, 0
      %vm1081 = vcmp.ne.s32.totalorder %v995, 0
      %vm1082 = vcmp.ne.s32.totalorder %v1002, 0
      %vm1083 = vcmp.ne.s32.totalorder %v1009, 0
      %vm1084 = vcmp.ne.s32.totalorder %v1016, 0
      %vm1085 = vcmp.ne.s32.totalorder %v1023, 0
      %vm1086 = vcmp.ne.s32.totalorder %v1030, 0
      %vm1087 = vcmp.ne.s32.totalorder %v1037, 0
      %vm1088 = vcmp.ne.s32.totalorder %v1044, 0
      %vm1089 = vcmp.ne.s32.totalorder %v1051, 0
      %vm1090 = vcmp.ne.s32.totalorder %v1058, 0
      %vm1091 = vcmp.lt.s32.totalorder %v841, 0
      %vm1092 = vcmp.lt.s32.totalorder %v848, 0
      %vm1093 = vcmp.lt.s32.totalorder %v855, 0
      %vm1094 = vcmp.lt.s32.totalorder %v862, 0
      %vm1095 = vcmp.lt.s32.totalorder %v869, 0
      %vm1096 = vcmp.lt.s32.totalorder %v876, 0
      %vm1097 = vcmp.lt.s32.totalorder %v883, 0
      %vm1098 = vcmp.lt.s32.totalorder %v890, 0
      %vm1099 = vcmp.lt.s32.totalorder %v897, 0
      %vm1100 = vcmp.lt.s32.totalorder %v904, 0
      %vm1101 = vcmp.lt.s32.totalorder %v911, 0
      %vm1102 = vcmp.lt.s32.totalorder %v918, 0
      %vm1103 = vcmp.lt.s32.totalorder %v925, 0
      %vm1104 = vcmp.lt.s32.totalorder %v932, 0
      %vm1105 = vcmp.lt.s32.totalorder %v939, 0
      %vm1106 = vcmp.lt.s32.totalorder %v946, 0
      %vm1107 = vcmp.lt.s32.totalorder %v953, 0
      %vm1108 = vcmp.lt.s32.totalorder %v960, 0
      %vm1109 = vcmp.lt.s32.totalorder %v967, 0
      %vm1110 = vcmp.lt.s32.totalorder %v974, 0
      %vm1111 = vcmp.lt.s32.totalorder %v981, 0
      %vm1112 = vcmp.lt.s32.totalorder %v988, 0
      %vm1113 = vcmp.lt.s32.totalorder %v995, 0
      %vm1114 = vcmp.lt.s32.totalorder %v1002, 0
      %vm1115 = vcmp.lt.s32.totalorder %v1009, 0
      %vm1116 = vcmp.lt.s32.totalorder %v1016, 0
      %vm1117 = vcmp.lt.s32.totalorder %v1023, 0
      %vm1118 = vcmp.lt.s32.totalorder %v1030, 0
      %vm1119 = vcmp.lt.s32.totalorder %v1037, 0
      %vm1120 = vcmp.lt.s32.totalorder %v1044, 0
      %vm1121 = vcmp.lt.s32.totalorder %v1051, 0
      %vm1122 = vcmp.lt.s32.totalorder %v1058, 0
      %vm1123 = vmand %vm1091, %vm1059
      %vm1124 = vmand %vm1092, %vm1060
      %vm1125 = vmand %vm1093, %vm1061
      %vm1126 = vmand %vm1094, %vm1062
      %vm1127 = vmand %vm1095, %vm1063
      %vm1128 = vmand %vm1096, %vm1064
      %vm1129 = vmand %vm1097, %vm1065
      %vm1130 = vmand %vm1098, %vm1066
      %vm1131 = vmand %vm1099, %vm1067
      %vm1132 = vmand %vm1100, %vm1068
      %vm1133 = vmand %vm1101, %vm1069
      %vm1134 = vmand %vm1102, %vm1070
      %vm1135 = vmand %vm1103, %vm1071
      %vm1136 = vmand %vm1104, %vm1072
      %vm1137 = vmand %vm1105, %vm1073
      %vm1138 = vmand %vm1106, %vm1074
      %vm1139 = vmand %vm1107, %vm1075
      %vm1140 = vmand %vm1108, %vm1076
      %vm1141 = vmand %vm1109, %vm1077
      %vm1142 = vmand %vm1110, %vm1078
      %vm1143 = vmand %vm1111, %vm1079
      %vm1144 = vmand %vm1112, %vm1080
      %vm1145 = vmand %vm1113, %vm1081
      %vm1146 = vmand %vm1114, %vm1082
      %vm1147 = vmand %vm1115, %vm1083
      %vm1148 = vmand %vm1116, %vm1084
      %vm1149 = vmand %vm1117, %vm1085
      %vm1150 = vmand %vm1118, %vm1086
      %vm1151 = vmand %vm1119, %vm1087
      %vm1152 = vmand %vm1120, %vm1088
      %vm1153 = vmand %vm1121, %vm1089
      %vm1154 = vmand %vm1122, %vm1090
      %v1155 = vadd.s32 %v841, 16
      %v1156 = vadd.s32 %v848, 16
      %v1157 = vadd.s32 %v855, 16
      %v1158 = vadd.s32 %v862, 16
      %v1159 = vadd.s32 %v869, 16
      %v1160 = vadd.s32 %v876, 16
      %v1161 = vadd.s32 %v883, 16
      %v1162 = vadd.s32 %v890, 16
      %v1163 = vadd.s32 %v897, 16
      %v1164 = vadd.s32 %v904, 16
      %v1165 = vadd.s32 %v911, 16
      %v1166 = vadd.s32 %v918, 16
      %v1167 = vadd.s32 %v925, 16
      %v1168 = vadd.s32 %v932, 16
      %v1169 = vadd.s32 %v939, 16
      %v1170 = vadd.s32 %v946, 16
      %v1171 = vadd.s32 %v953, 16
      %v1172 = vadd.s32 %v960, 16
      %v1173 = vadd.s32 %v967, 16
      %v1174 = vadd.s32 %v974, 16
      %v1175 = vadd.s32 %v981, 16
      %v1176 = vadd.s32 %v988, 16
      %v1177 = vadd.s32 %v995, 16
      %v1178 = vadd.s32 %v1002, 16
      %v1179 = vadd.s32 %v1009, 16
      %v1180 = vadd.s32 %v1016, 16
      %v1181 = vadd.s32 %v1023, 16
      %v1182 = vadd.s32 %v1030, 16
      %v1183 = vadd.s32 %v1037, 16
      %v1184 = vadd.s32 %v1044, 16
      %v1185 = vadd.s32 %v1051, 16
      %v1186 = vadd.s32 %v1058, 16
      %v1187 = vsel %vm1123, %v1155, %v841
      %v1188 = vsel %vm1124, %v1156, %v848
      %v1189 = vsel %vm1125, %v1157, %v855
      %v1190 = vsel %vm1126, %v1158, %v862
      %v1191 = vsel %vm1127, %v1159, %v869
      %v1192 = vsel %vm1128, %v1160, %v876
      %v1193 = vsel %vm1129, %v1161, %v883
      %v1194 = vsel %vm1130, %v1162, %v890
      %v1195 = vsel %vm1131, %v1163, %v897
      %v1196 = vsel %vm1132, %v1164, %v904
      %v1197 = vsel %vm1133, %v1165, %v911
      %v1198 = vsel %vm1134, %v1166, %v918
      %v1199 = vsel %vm1135, %v1167, %v925
      %v1200 = vsel %vm1136, %v1168, %v932
      %v1201 = vsel %vm1137, %v1169, %v939
      %v1202 = vsel %vm1138, %v1170, %v946
      %v1203 = vsel %vm1139, %v1171, %v953
      %v1204 = vsel %vm1140, %v1172, %v960
      %v1205 = vsel %vm1141, %v1173, %v967
      %v1206 = vsel %vm1142, %v1174, %v974
      %v1207 = vsel %vm1143, %v1175, %v981
      %v1208 = vsel %vm1144, %v1176, %v988
      %v1209 = vsel %vm1145, %v1177, %v995
      %v1210 = vsel %vm1146, %v1178, %v1002
      %v1211 = vsel %vm1147, %v1179, %v1009
      %v1212 = vsel %vm1148, %v1180, %v1016
      %v1213 = vsel %vm1149, %v1181, %v1023
      %v1214 = vsel %vm1150, %v1182, %v1030
      %v1215 = vsel %vm1151, %v1183, %v1037
      %v1216 = vsel %vm1152, %v1184, %v1044
      %v1217 = vsel %vm1153, %v1185, %v1051
      %v1218 = vsel %vm1154, %v1186, %v1058
      %vm1219 = vcmp.ge.s32.totalorder %v1187, 1
      %vm1220 = vcmp.ge.s32.totalorder %v1188, 1
      %vm1221 = vcmp.ge.s32.totalorder %v1189, 1
      %vm1222 = vcmp.ge.s32.totalorder %v1190, 1
      %vm1223 = vcmp.ge.s32.totalorder %v1191, 1
      %vm1224 = vcmp.ge.s32.totalorder %v1192, 1
      %vm1225 = vcmp.ge.s32.totalorder %v1193, 1
      %vm1226 = vcmp.ge.s32.totalorder %v1194, 1
      %vm1227 = vcmp.ge.s32.totalorder %v1195, 1
      %vm1228 = vcmp.ge.s32.totalorder %v1196, 1
      %vm1229 = vcmp.ge.s32.totalorder %v1197, 1
      %vm1230 = vcmp.ge.s32.totalorder %v1198, 1
      %vm1231 = vcmp.ge.s32.totalorder %v1199, 1
      %vm1232 = vcmp.ge.s32.totalorder %v1200, 1
      %vm1233 = vcmp.ge.s32.totalorder %v1201, 1
      %vm1234 = vcmp.ge.s32.totalorder %v1202, 1
      %vm1235 = vcmp.ge.s32.totalorder %v1203, 1
      %vm1236 = vcmp.ge.s32.totalorder %v1204, 1
      %vm1237 = vcmp.ge.s32.totalorder %v1205, 1
      %vm1238 = vcmp.ge.s32.totalorder %v1206, 1
      %vm1239 = vcmp.ge.s32.totalorder %v1207, 1
      %vm1240 = vcmp.ge.s32.totalorder %v1208, 1
      %vm1241 = vcmp.ge.s32.totalorder %v1209, 1
      %vm1242 = vcmp.ge.s32.totalorder %v1210, 1
      %vm1243 = vcmp.ge.s32.totalorder %v1211, 1
      %vm1244 = vcmp.ge.s32.totalorder %v1212, 1
      %vm1245 = vcmp.ge.s32.totalorder %v1213, 1
      %vm1246 = vcmp.ge.s32.totalorder %v1214, 1
      %vm1247 = vcmp.ge.s32.totalorder %v1215, 1
      %vm1248 = vcmp.ge.s32.totalorder %v1216, 1
      %vm1249 = vcmp.ge.s32.totalorder %v1217, 1
      %vm1250 = vcmp.ge.s32.totalorder %v1218, 1
      %v1251 = vrot.slane %v770, 7
      %v1252 = vrot.slane %v771, 7
      %v1253 = vrot.slane %v772, 7
      %v1254 = vrot.slane %v773, 7
      %v1255 = vrot.slane %v774, 7
      %v1256 = vrot.slane %v775, 7
      %v1257 = vrot.slane %v776, 7
      %v1258 = vrot.slane %v777, 7
      %v1259 = vrot.slane %v778, 7
      %v1260 = vrot.slane %v779, 7
      %v1261 = vrot.slane %v780, 7
      %v1262 = vrot.slane %v781, 7
      %v1263 = vrot.slane %v782, 7
      %v1264 = vrot.slane %v783, 7
      %v1265 = vrot.slane %v784, 7
      %v1266 = vrot.slane %v785, 7
      %v1267 = vrot.slane %v786, 7
      %v1268 = vrot.slane %v787, 7
      %v1269 = vrot.slane %v788, 7
      %v1270 = vrot.slane %v789, 7
      %v1271 = vrot.slane %v790, 7
      %v1272 = vrot.slane %v791, 7
      %v1273 = vrot.slane %v792, 7
      %v1274 = vrot.slane %v793, 7
      %v1275 = vrot.slane %v794, 7
      %v1276 = vrot.slane %v795, 7
      %v1277 = vrot.slane %v796, 7
      %v1278 = vrot.slane %v797, 7
      %v1279 = vrot.slane %v798, 7
      %v1280 = vrot.slane %v799, 7
      %v1281 = vrot.slane %v800, 7
      %v1282 = vrot.slane %v801, 7
      %vm1283 = vcmp.lt.s32.totalorder %v803, 1
      %v1284 = vsel %vm1283, %v1281, %v1282
      %v1285 = vsel %vm1283, %v1280, %v1281
      %v1286 = vsel %vm1283, %v1279, %v1280
      %v1287 = vsel %vm1283, %v1278, %v1279
      %v1288 = vsel %vm1283, %v1277, %v1278
      %v1289 = vsel %vm1283, %v1276, %v1277
      %v1290 = vsel %vm1283, %v1275, %v1276
      %v1291 = vsel %vm1283, %v1274, %v1275
      %v1292 = vsel %vm1283, %v1273, %v1274
      %v1293 = vsel %vm1283, %v1272, %v1273
      %v1294 = vsel %vm1283, %v1271, %v1272
      %v1295 = vsel %vm1283, %v1270, %v1271
      %v1296 = vsel %vm1283, %v1269, %v1270
      %v1297 = vsel %vm1283, %v1268, %v1269
      %v1298 = vsel %vm1283, %v1267, %v1268
      %v1299 = vsel %vm1283, %v1266, %v1267
      %v1300 = vsel %vm1283, %v1265, %v1266
      %v1301 = vsel %vm1283, %v1264, %v1265
      %v1302 = vsel %vm1283, %v1263, %v1264
      %v1303 = vsel %vm1283, %v1262, %v1263
      %v1304 = vsel %vm1283, %v1261, %v1262
      %v1305 = vsel %vm1283, %v1260, %v1261
      %v1306 = vsel %vm1283, %v1259, %v1260
      %v1307 = vsel %vm1283, %v1258, %v1259
      %v1308 = vsel %vm1283, %v1257, %v1258
      %v1309 = vsel %vm1283, %v1256, %v1257
      %v1310 = vsel %vm1283, %v1255, %v1256
      %v1311 = vsel %vm1283, %v1254, %v1255
      %v1312 = vsel %vm1283, %v1253, %v1254
      %v1313 = vsel %vm1283, %v1252, %v1253
      %v1314 = vsel %vm1283, %v1251, %v1252
      %v1315 = vsel %vm1283, %v1282, %v1251
      %v1316 = vsel %vm1219, 1, 0
      %v1317 = vsel %vm1220, 1, 0
      %v1318 = vsel %vm1221, 1, 0
      %v1319 = vsel %vm1222, 1, 0
      %v1320 = vsel %vm1223, 1, 0
      %v1321 = vsel %vm1224, 1, 0
      %v1322 = vsel %vm1225, 1, 0
      %v1323 = vsel %vm1226, 1, 0
      %v1324 = vsel %vm1227, 1, 0
      %v1325 = vsel %vm1228, 1, 0
      %v1326 = vsel %vm1229, 1, 0
      %v1327 = vsel %vm1230, 1, 0
      %v1328 = vsel %vm1231, 1, 0
      %v1329 = vsel %vm1232, 1, 0
      %v1330 = vsel %vm1233, 1, 0
      %v1331 = vsel %vm1234, 1, 0
      %v1332 = vsel %vm1235, 1, 0
      %v1333 = vsel %vm1236, 1, 0
      %v1334 = vsel %vm1237, 1, 0
      %v1335 = vsel %vm1238, 1, 0
      %v1336 = vsel %vm1239, 1, 0
      %v1337 = vsel %vm1240, 1, 0
      %v1338 = vsel %vm1241, 1, 0
      %v1339 = vsel %vm1242, 1, 0
      %v1340 = vsel %vm1243, 1, 0
      %v1341 = vsel %vm1244, 1, 0
      %v1342 = vsel %vm1245, 1, 0
      %v1343 = vsel %vm1246, 1, 0
      %v1344 = vsel %vm1247, 1, 0
      %v1345 = vsel %vm1248, 1, 0
      %v1346 = vsel %vm1249, 1, 0
      %v1347 = vsel %vm1250, 1, 0
      %vm1348 = vcmp.eq.s32.totalorder %v1316, 1
      %vm1349 = vcmp.eq.s32.totalorder %v1317, 1
      %vm1350 = vcmp.eq.s32.totalorder %v1318, 1
      %vm1351 = vcmp.eq.s32.totalorder %v1319, 1
      %vm1352 = vcmp.eq.s32.totalorder %v1320, 1
      %vm1353 = vcmp.eq.s32.totalorder %v1321, 1
      %vm1354 = vcmp.eq.s32.totalorder %v1322, 1
      %vm1355 = vcmp.eq.s32.totalorder %v1323, 1
      %vm1356 = vcmp.eq.s32.totalorder %v1324, 1
      %vm1357 = vcmp.eq.s32.totalorder %v1325, 1
      %vm1358 = vcmp.eq.s32.totalorder %v1326, 1
      %vm1359 = vcmp.eq.s32.totalorder %v1327, 1
      %vm1360 = vcmp.eq.s32.totalorder %v1328, 1
      %vm1361 = vcmp.eq.s32.totalorder %v1329, 1
      %vm1362 = vcmp.eq.s32.totalorder %v1330, 1
      %vm1363 = vcmp.eq.s32.totalorder %v1331, 1
      %vm1364 = vcmp.eq.s32.totalorder %v1332, 1
      %vm1365 = vcmp.eq.s32.totalorder %v1333, 1
      %vm1366 = vcmp.eq.s32.totalorder %v1334, 1
      %vm1367 = vcmp.eq.s32.totalorder %v1335, 1
      %vm1368 = vcmp.eq.s32.totalorder %v1336, 1
      %vm1369 = vcmp.eq.s32.totalorder %v1337, 1
      %vm1370 = vcmp.eq.s32.totalorder %v1338, 1
      %vm1371 = vcmp.eq.s32.totalorder %v1339, 1
      %vm1372 = vcmp.eq.s32.totalorder %v1340, 1
      %vm1373 = vcmp.eq.s32.totalorder %v1341, 1
      %vm1374 = vcmp.eq.s32.totalorder %v1342, 1
      %vm1375 = vcmp.eq.s32.totalorder %v1343, 1
      %vm1376 = vcmp.eq.s32.totalorder %v1344, 1
      %vm1377 = vcmp.eq.s32.totalorder %v1345, 1
      %vm1378 = vcmp.eq.s32.totalorder %v1346, 1
      %vm1379 = vcmp.eq.s32.totalorder %v1347, 1
      %v1380 = vsel %vm1348, %v1315, 0.0
      %v1381 = vsel %vm1349, %v1314, 0.0
      %v1382 = vsel %vm1350, %v1313, 0.0
      %v1383 = vsel %vm1351, %v1312, 0.0
      %v1384 = vsel %vm1352, %v1311, 0.0
      %v1385 = vsel %vm1353, %v1310, 0.0
      %v1386 = vsel %vm1354, %v1309, 0.0
      %v1387 = vsel %vm1355, %v1308, 0.0
      %v1388 = vsel %vm1356, %v1307, 0.0
      %v1389 = vsel %vm1357, %v1306, 0.0
      %v1390 = vsel %vm1358, %v1305, 0.0
      %v1391 = vsel %vm1359, %v1304, 0.0
      %v1392 = vsel %vm1360, %v1303, 0.0
      %v1393 = vsel %vm1361, %v1302, 0.0
      %v1394 = vsel %vm1362, %v1301, 0.0
      %v1395 = vsel %vm1363, %v1300, 0.0
      %v1396 = vsel %vm1364, %v1299, 0.0
      %v1397 = vsel %vm1365, %v1298, 0.0
      %v1398 = vsel %vm1366, %v1297, 0.0
      %v1399 = vsel %vm1367, %v1296, 0.0
      %v1400 = vsel %vm1368, %v1295, 0.0
      %v1401 = vsel %vm1369, %v1294, 0.0
      %v1402 = vsel %vm1370, %v1293, 0.0
      %v1403 = vsel %vm1371, %v1292, 0.0
      %v1404 = vsel %vm1372, %v1291, 0.0
      %v1405 = vsel %vm1373, %v1290, 0.0
      %v1406 = vsel %vm1374, %v1289, 0.0
      %v1407 = vsel %vm1375, %v1288, 0.0
      %v1408 = vsel %vm1376, %v1287, 0.0
      %v1409 = vsel %vm1377, %v1286, 0.0
      %v1410 = vsel %vm1378, %v1285, 0.0
      %v1411 = vsel %vm1379, %v1284, 0.0
      %vm1412 = vcmp.le.s32.totalorder %v1187, 14
      %vm1413 = vcmp.le.s32.totalorder %v1188, 14
      %vm1414 = vcmp.le.s32.totalorder %v1189, 14
      %vm1415 = vcmp.le.s32.totalorder %v1190, 14
      %vm1416 = vcmp.le.s32.totalorder %v1191, 14
      %vm1417 = vcmp.le.s32.totalorder %v1192, 14
      %vm1418 = vcmp.le.s32.totalorder %v1193, 14
      %vm1419 = vcmp.le.s32.totalorder %v1194, 14
      %vm1420 = vcmp.le.s32.totalorder %v1195, 14
      %vm1421 = vcmp.le.s32.totalorder %v1196, 14
      %vm1422 = vcmp.le.s32.totalorder %v1197, 14
      %vm1423 = vcmp.le.s32.totalorder %v1198, 14
      %vm1424 = vcmp.le.s32.totalorder %v1199, 14
      %vm1425 = vcmp.le.s32.totalorder %v1200, 14
      %vm1426 = vcmp.le.s32.totalorder %v1201, 14
      %vm1427 = vcmp.le.s32.totalorder %v1202, 14
      %vm1428 = vcmp.le.s32.totalorder %v1203, 14
      %vm1429 = vcmp.le.s32.totalorder %v1204, 14
      %vm1430 = vcmp.le.s32.totalorder %v1205, 14
      %vm1431 = vcmp.le.s32.totalorder %v1206, 14
      %vm1432 = vcmp.le.s32.totalorder %v1207, 14
      %vm1433 = vcmp.le.s32.totalorder %v1208, 14
      %vm1434 = vcmp.le.s32.totalorder %v1209, 14
      %vm1435 = vcmp.le.s32.totalorder %v1210, 14
      %vm1436 = vcmp.le.s32.totalorder %v1211, 14
      %vm1437 = vcmp.le.s32.totalorder %v1212, 14
      %vm1438 = vcmp.le.s32.totalorder %v1213, 14
      %vm1439 = vcmp.le.s32.totalorder %v1214, 14
      %vm1440 = vcmp.le.s32.totalorder %v1215, 14
      %vm1441 = vcmp.le.s32.totalorder %v1216, 14
      %vm1442 = vcmp.le.s32.totalorder %v1217, 14
      %vm1443 = vcmp.le.s32.totalorder %v1218, 14
      %v1444 = vrot.slane %v770, 1
      %v1445 = vrot.slane %v771, 1
      %v1446 = vrot.slane %v772, 1
      %v1447 = vrot.slane %v773, 1
      %v1448 = vrot.slane %v774, 1
      %v1449 = vrot.slane %v775, 1
      %v1450 = vrot.slane %v776, 1
      %v1451 = vrot.slane %v777, 1
      %v1452 = vrot.slane %v778, 1
      %v1453 = vrot.slane %v779, 1
      %v1454 = vrot.slane %v780, 1
      %v1455 = vrot.slane %v781, 1
      %v1456 = vrot.slane %v782, 1
      %v1457 = vrot.slane %v783, 1
      %v1458 = vrot.slane %v784, 1
      %v1459 = vrot.slane %v785, 1
      %v1460 = vrot.slane %v786, 1
      %v1461 = vrot.slane %v787, 1
      %v1462 = vrot.slane %v788, 1
      %v1463 = vrot.slane %v789, 1
      %v1464 = vrot.slane %v790, 1
      %v1465 = vrot.slane %v791, 1
      %v1466 = vrot.slane %v792, 1
      %v1467 = vrot.slane %v793, 1
      %v1468 = vrot.slane %v794, 1
      %v1469 = vrot.slane %v795, 1
      %v1470 = vrot.slane %v796, 1
      %v1471 = vrot.slane %v797, 1
      %v1472 = vrot.slane %v798, 1
      %v1473 = vrot.slane %v799, 1
      %v1474 = vrot.slane %v800, 1
      %v1475 = vrot.slane %v801, 1
      %vm1476 = vcmp.lt.s32.totalorder %v803, 7
      %v1477 = vsel %vm1476, %v1474, %v1475
      %v1478 = vsel %vm1476, %v1473, %v1474
      %v1479 = vsel %vm1476, %v1472, %v1473
      %v1480 = vsel %vm1476, %v1471, %v1472
      %v1481 = vsel %vm1476, %v1470, %v1471
      %v1482 = vsel %vm1476, %v1469, %v1470
      %v1483 = vsel %vm1476, %v1468, %v1469
      %v1484 = vsel %vm1476, %v1467, %v1468
      %v1485 = vsel %vm1476, %v1466, %v1467
      %v1486 = vsel %vm1476, %v1465, %v1466
      %v1487 = vsel %vm1476, %v1464, %v1465
      %v1488 = vsel %vm1476, %v1463, %v1464
      %v1489 = vsel %vm1476, %v1462, %v1463
      %v1490 = vsel %vm1476, %v1461, %v1462
      %v1491 = vsel %vm1476, %v1460, %v1461
      %v1492 = vsel %vm1476, %v1459, %v1460
      %v1493 = vsel %vm1476, %v1458, %v1459
      %v1494 = vsel %vm1476, %v1457, %v1458
      %v1495 = vsel %vm1476, %v1456, %v1457
      %v1496 = vsel %vm1476, %v1455, %v1456
      %v1497 = vsel %vm1476, %v1454, %v1455
      %v1498 = vsel %vm1476, %v1453, %v1454
      %v1499 = vsel %vm1476, %v1452, %v1453
      %v1500 = vsel %vm1476, %v1451, %v1452
      %v1501 = vsel %vm1476, %v1450, %v1451
      %v1502 = vsel %vm1476, %v1449, %v1450
      %v1503 = vsel %vm1476, %v1448, %v1449
      %v1504 = vsel %vm1476, %v1447, %v1448
      %v1505 = vsel %vm1476, %v1446, %v1447
      %v1506 = vsel %vm1476, %v1445, %v1446
      %v1507 = vsel %vm1476, %v1444, %v1445
      %v1508 = vsel %vm1476, %v1475, %v1444
      %v1509 = vsel %vm1412, 1, 0
      %v1510 = vsel %vm1413, 1, 0
      %v1511 = vsel %vm1414, 1, 0
      %v1512 = vsel %vm1415, 1, 0
      %v1513 = vsel %vm1416, 1, 0
      %v1514 = vsel %vm1417, 1, 0
      %v1515 = vsel %vm1418, 1, 0
      %v1516 = vsel %vm1419, 1, 0
      %v1517 = vsel %vm1420, 1, 0
      %v1518 = vsel %vm1421, 1, 0
      %v1519 = vsel %vm1422, 1, 0
      %v1520 = vsel %vm1423, 1, 0
      %v1521 = vsel %vm1424, 1, 0
      %v1522 = vsel %vm1425, 1, 0
      %v1523 = vsel %vm1426, 1, 0
      %v1524 = vsel %vm1427, 1, 0
      %v1525 = vsel %vm1428, 1, 0
      %v1526 = vsel %vm1429, 1, 0
      %v1527 = vsel %vm1430, 1, 0
      %v1528 = vsel %vm1431, 1, 0
      %v1529 = vsel %vm1432, 1, 0
      %v1530 = vsel %vm1433, 1, 0
      %v1531 = vsel %vm1434, 1, 0
      %v1532 = vsel %vm1435, 1, 0
      %v1533 = vsel %vm1436, 1, 0
      %v1534 = vsel %vm1437, 1, 0
      %v1535 = vsel %vm1438, 1, 0
      %v1536 = vsel %vm1439, 1, 0
      %v1537 = vsel %vm1440, 1, 0
      %v1538 = vsel %vm1441, 1, 0
      %v1539 = vsel %vm1442, 1, 0
      %v1540 = vsel %vm1443, 1, 0
      %vm1541 = vcmp.eq.s32.totalorder %v1509, 1
      %vm1542 = vcmp.eq.s32.totalorder %v1510, 1
      %vm1543 = vcmp.eq.s32.totalorder %v1511, 1
      %vm1544 = vcmp.eq.s32.totalorder %v1512, 1
      %vm1545 = vcmp.eq.s32.totalorder %v1513, 1
      %vm1546 = vcmp.eq.s32.totalorder %v1514, 1
      %vm1547 = vcmp.eq.s32.totalorder %v1515, 1
      %vm1548 = vcmp.eq.s32.totalorder %v1516, 1
      %vm1549 = vcmp.eq.s32.totalorder %v1517, 1
      %vm1550 = vcmp.eq.s32.totalorder %v1518, 1
      %vm1551 = vcmp.eq.s32.totalorder %v1519, 1
      %vm1552 = vcmp.eq.s32.totalorder %v1520, 1
      %vm1553 = vcmp.eq.s32.totalorder %v1521, 1
      %vm1554 = vcmp.eq.s32.totalorder %v1522, 1
      %vm1555 = vcmp.eq.s32.totalorder %v1523, 1
      %vm1556 = vcmp.eq.s32.totalorder %v1524, 1
      %vm1557 = vcmp.eq.s32.totalorder %v1525, 1
      %vm1558 = vcmp.eq.s32.totalorder %v1526, 1
      %vm1559 = vcmp.eq.s32.totalorder %v1527, 1
      %vm1560 = vcmp.eq.s32.totalorder %v1528, 1
      %vm1561 = vcmp.eq.s32.totalorder %v1529, 1
      %vm1562 = vcmp.eq.s32.totalorder %v1530, 1
      %vm1563 = vcmp.eq.s32.totalorder %v1531, 1
      %vm1564 = vcmp.eq.s32.totalorder %v1532, 1
      %vm1565 = vcmp.eq.s32.totalorder %v1533, 1
      %vm1566 = vcmp.eq.s32.totalorder %v1534, 1
      %vm1567 = vcmp.eq.s32.totalorder %v1535, 1
      %vm1568 = vcmp.eq.s32.totalorder %v1536, 1
      %vm1569 = vcmp.eq.s32.totalorder %v1537, 1
      %vm1570 = vcmp.eq.s32.totalorder %v1538, 1
      %vm1571 = vcmp.eq.s32.totalorder %v1539, 1
      %vm1572 = vcmp.eq.s32.totalorder %v1540, 1
      %v1573 = vsel %vm1541, %v1507, 0.0
      %v1574 = vsel %vm1542, %v1506, 0.0
      %v1575 = vsel %vm1543, %v1505, 0.0
      %v1576 = vsel %vm1544, %v1504, 0.0
      %v1577 = vsel %vm1545, %v1503, 0.0
      %v1578 = vsel %vm1546, %v1502, 0.0
      %v1579 = vsel %vm1547, %v1501, 0.0
      %v1580 = vsel %vm1548, %v1500, 0.0
      %v1581 = vsel %vm1549, %v1499, 0.0
      %v1582 = vsel %vm1550, %v1498, 0.0
      %v1583 = vsel %vm1551, %v1497, 0.0
      %v1584 = vsel %vm1552, %v1496, 0.0
      %v1585 = vsel %vm1553, %v1495, 0.0
      %v1586 = vsel %vm1554, %v1494, 0.0
      %v1587 = vsel %vm1555, %v1493, 0.0
      %v1588 = vsel %vm1556, %v1492, 0.0
      %v1589 = vsel %vm1557, %v1491, 0.0
      %v1590 = vsel %vm1558, %v1490, 0.0
      %v1591 = vsel %vm1559, %v1489, 0.0
      %v1592 = vsel %vm1560, %v1488, 0.0
      %v1593 = vsel %vm1561, %v1487, 0.0
      %v1594 = vsel %vm1562, %v1486, 0.0
      %v1595 = vsel %vm1563, %v1485, 0.0
      %v1596 = vsel %vm1564, %v1484, 0.0
      %v1597 = vsel %vm1565, %v1483, 0.0
      %v1598 = vsel %vm1566, %v1482, 0.0
      %v1599 = vsel %vm1567, %v1481, 0.0
      %v1600 = vsel %vm1568, %v1480, 0.0
      %v1601 = vsel %vm1569, %v1479, 0.0
      %v1602 = vsel %vm1570, %v1478, 0.0
      %v1603 = vsel %vm1571, %v1477, 0.0
      %v1604 = vsel %vm1572, %v1508, 0.0
      %1637 = vrot.lane.b32.xlu0 %v770, 4
      %v1638 = vpop.permute.xlu0 %1637
      %1639 = vrot.lane.b32.xlu0 %v771, 4
      %v1640 = vpop.permute.xlu0 %1639
      %1641 = vrot.lane.b32.xlu0 %v772, 4
      %v1642 = vpop.permute.xlu0 %1641
      %1643 = vrot.lane.b32.xlu0 %v773, 4
      %v1644 = vpop.permute.xlu0 %1643
      %1645 = vrot.lane.b32.xlu0 %v774, 4
      %v1646 = vpop.permute.xlu0 %1645
      %1647 = vrot.lane.b32.xlu0 %v775, 4
      %v1648 = vpop.permute.xlu0 %1647
      %1649 = vrot.lane.b32.xlu0 %v776, 4
      %v1650 = vpop.permute.xlu0 %1649
      %1651 = vrot.lane.b32.xlu0 %v777, 4
      %v1652 = vpop.permute.xlu0 %1651
      %1653 = vrot.lane.b32.xlu0 %v778, 4
      %v1654 = vpop.permute.xlu0 %1653
      %1655 = vrot.lane.b32.xlu0 %v779, 4
      %v1656 = vpop.permute.xlu0 %1655
      %1657 = vrot.lane.b32.xlu0 %v780, 4
      %v1658 = vpop.permute.xlu0 %1657
      %1659 = vrot.lane.b32.xlu0 %v781, 4
      %v1660 = vpop.permute.xlu0 %1659
      %1661 = vrot.lane.b32.xlu0 %v782, 4
      %v1662 = vpop.permute.xlu0 %1661
      %1663 = vrot.lane.b32.xlu0 %v783, 4
      %v1664 = vpop.permute.xlu0 %1663
      %1665 = vrot.lane.b32.xlu0 %v784, 4
      %v1666 = vpop.permute.xlu0 %1665
      %1667 = vrot.lane.b32.xlu0 %v785, 4
      %v1668 = vpop.permute.xlu0 %1667
      %1669 = vrot.lane.b32.xlu0 %v786, 4
      %v1670 = vpop.permute.xlu0 %1669
      %1671 = vrot.lane.b32.xlu0 %v787, 4
      %v1672 = vpop.permute.xlu0 %1671
      %1673 = vrot.lane.b32.xlu0 %v788, 4
      %v1674 = vpop.permute.xlu0 %1673
      %1675 = vrot.lane.b32.xlu0 %v789, 4
      %v1676 = vpop.permute.xlu0 %1675
      %1677 = vrot.lane.b32.xlu0 %v790, 4
      %v1678 = vpop.permute.xlu0 %1677
      %1679 = vrot.lane.b32.xlu0 %v791, 4
      %v1680 = vpop.permute.xlu0 %1679
      %1681 = vrot.lane.b32.xlu0 %v792, 4
      %v1682 = vpop.permute.xlu0 %1681
      %1683 = vrot.lane.b32.xlu0 %v793, 4
      %v1684 = vpop.permute.xlu0 %1683
      %1685 = vrot.lane.b32.xlu0 %v794, 4
      %v1686 = vpop.permute.xlu0 %1685
      %1687 = vrot.lane.b32.xlu0 %v795, 4
      %v1688 = vpop.permute.xlu0 %1687
      %1689 = vrot.lane.b32.xlu0 %v796, 4
      %v1690 = vpop.permute.xlu0 %1689
      %1691 = vrot.lane.b32.xlu0 %v797, 4
      %v1692 = vpop.permute.xlu0 %1691
      %1693 = vrot.lane.b32.xlu0 %v798, 4
      %v1694 = vpop.permute.xlu0 %1693
      %1695 = vrot.lane.b32.xlu0 %v799, 4
      %v1696 = vpop.permute.xlu0 %1695
      %1697 = vrot.lane.b32.xlu0 %v800, 4
      %v1698 = vpop.permute.xlu0 %1697
      %1699 = vrot.lane.b32.xlu0 %v801, 4
      %v1700 = vpop.permute.xlu0 %1699
      %1765 = vrot.lane.b32.xlu0 %v1573, 8
      %v1766 = vpop.permute.xlu0 %1765
      %1767 = vrot.lane.b32.xlu0 %v1574, 8
      %v1768 = vpop.permute.xlu0 %1767
      %1769 = vrot.lane.b32.xlu0 %v1575, 8
      %v1770 = vpop.permute.xlu0 %1769
      %1771 = vrot.lane.b32.xlu0 %v1576, 8
      %v1772 = vpop.permute.xlu0 %1771
      %1773 = vrot.lane.b32.xlu0 %v1577, 8
      %v1774 = vpop.permute.xlu0 %1773
      %1775 = vrot.lane.b32.xlu0 %v1578, 8
      %v1776 = vpop.permute.xlu0 %1775
      %1777 = vrot.lane.b32.xlu0 %v1579, 8
      %v1778 = vpop.permute.xlu0 %1777
      %1779 = vrot.lane.b32.xlu0 %v1580, 8
      %v1780 = vpop.permute.xlu0 %1779
      %1781 = vrot.lane.b32.xlu0 %v1581, 8
      %v1782 = vpop.permute.xlu0 %1781
      %1783 = vrot.lane.b32.xlu0 %v1582, 8
      %v1784 = vpop.permute.xlu0 %1783
      %1785 = vrot.lane.b32.xlu0 %v1583, 8
      %v1786 = vpop.permute.xlu0 %1785
      %1787 = vrot.lane.b32.xlu0 %v1584, 8
      %v1788 = vpop.permute.xlu0 %1787
      %1789 = vrot.lane.b32.xlu0 %v1585, 8
      %v1790 = vpop.permute.xlu0 %1789
      %1791 = vrot.lane.b32.xlu0 %v1586, 8
      %v1792 = vpop.permute.xlu0 %1791
      %1793 = vrot.lane.b32.xlu0 %v1587, 8
      %v1794 = vpop.permute.xlu0 %1793
      %1795 = vrot.lane.b32.xlu0 %v1588, 8
      %v1796 = vpop.permute.xlu0 %1795
      %1797 = vrot.lane.b32.xlu0 %v1589, 8
      %v1798 = vpop.permute.xlu0 %1797
      %1799 = vrot.lane.b32.xlu0 %v1590, 8
      %v1800 = vpop.permute.xlu0 %1799
      %1801 = vrot.lane.b32.xlu0 %v1591, 8
      %v1802 = vpop.permute.xlu0 %1801
      %1803 = vrot.lane.b32.xlu0 %v1592, 8
      %v1804 = vpop.permute.xlu0 %1803
      %1805 = vrot.lane.b32.xlu0 %v1593, 8
      %v1806 = vpop.permute.xlu0 %1805
      %1807 = vrot.lane.b32.xlu0 %v1594, 8
      %v1808 = vpop.permute.xlu0 %1807
      %1809 = vrot.lane.b32.xlu0 %v1595, 8
      %v1810 = vpop.permute.xlu0 %1809
      %1811 = vrot.lane.b32.xlu0 %v1596, 8
      %v1812 = vpop.permute.xlu0 %1811
      %1813 = vrot.lane.b32.xlu0 %v1597, 8
      %v1814 = vpop.permute.xlu0 %1813
      %1815 = vrot.lane.b32.xlu0 %v1598, 8
      %v1816 = vpop.permute.xlu0 %1815
      %1817 = vrot.lane.b32.xlu0 %v1599, 8
      %v1818 = vpop.permute.xlu0 %1817
      %1819 = vrot.lane.b32.xlu0 %v1600, 8
      %v1820 = vpop.permute.xlu0 %1819
      %1821 = vrot.lane.b32.xlu0 %v1601, 8
      %v1822 = vpop.permute.xlu0 %1821
      %1823 = vrot.lane.b32.xlu0 %v1602, 8
      %v1824 = vpop.permute.xlu0 %1823
      %1825 = vrot.lane.b32.xlu0 %v1603, 8
      %v1826 = vpop.permute.xlu0 %1825
      %1827 = vrot.lane.b32.xlu0 %v1604, 8
      %v1828 = vpop.permute.xlu0 %1827
      %vm1861 = vcmask 31744
      %v1862 = vsel %vm1861, %v1380, %v1638
      %v1863 = vsel %vm1861, %v1381, %v1640
      %v1864 = vsel %vm1861, %v1382, %v1642
      %v1865 = vsel %vm1861, %v1383, %v1644
      %v1866 = vsel %vm1861, %v1384, %v1646
      %v1867 = vsel %vm1861, %v1385, %v1648
      %v1868 = vsel %vm1861, %v1386, %v1650
      %v1869 = vsel %vm1861, %v1387, %v1652
      %v1870 = vsel %vm1861, %v1388, %v1654
      %v1871 = vsel %vm1861, %v1389, %v1656
      %v1872 = vsel %vm1861, %v1390, %v1658
      %v1873 = vsel %vm1861, %v1391, %v1660
      %v1874 = vsel %vm1861, %v1392, %v1662
      %v1875 = vsel %vm1861, %v1393, %v1664
      %v1876 = vsel %vm1861, %v1394, %v1666
      %v1877 = vsel %vm1861, %v1395, %v1668
      %v1878 = vsel %vm1861, %v1396, %v1670
      %v1879 = vsel %vm1861, %v1397, %v1672
      %v1880 = vsel %vm1861, %v1398, %v1674
      %v1881 = vsel %vm1861, %v1399, %v1676
      %v1882 = vsel %vm1861, %v1400, %v1678
      %v1883 = vsel %vm1861, %v1401, %v1680
      %v1884 = vsel %vm1861, %v1402, %v1682
      %v1885 = vsel %vm1861, %v1403, %v1684
      %v1886 = vsel %vm1861, %v1404, %v1686
      %v1887 = vsel %vm1861, %v1405, %v1688
      %v1888 = vsel %vm1861, %v1406, %v1690
      %v1889 = vsel %vm1861, %v1407, %v1692
      %v1890 = vsel %vm1861, %v1408, %v1694
      %v1891 = vsel %vm1861, %v1409, %v1696
      %v1892 = vsel %vm1861, %v1410, %v1698
      %v1893 = vsel %vm1861, %v1411, %v1700
      %v1894 = vsel %vm412, %v1862, %v1766
      %v1895 = vsel %vm412, %v1863, %v1768
      %v1896 = vsel %vm412, %v1864, %v1770
      %v1897 = vsel %vm412, %v1865, %v1772
      %v1898 = vsel %vm412, %v1866, %v1774
      %v1899 = vsel %vm412, %v1867, %v1776
      %v1900 = vsel %vm412, %v1868, %v1778
      %v1901 = vsel %vm412, %v1869, %v1780
      %v1902 = vsel %vm412, %v1870, %v1782
      %v1903 = vsel %vm412, %v1871, %v1784
      %v1904 = vsel %vm412, %v1872, %v1786
      %v1905 = vsel %vm412, %v1873, %v1788
      %v1906 = vsel %vm412, %v1874, %v1790
      %v1907 = vsel %vm412, %v1875, %v1792
      %v1908 = vsel %vm412, %v1876, %v1794
      %v1909 = vsel %vm412, %v1877, %v1796
      %v1910 = vsel %vm412, %v1878, %v1798
      %v1911 = vsel %vm412, %v1879, %v1800
      %v1912 = vsel %vm412, %v1880, %v1802
      %v1913 = vsel %vm412, %v1881, %v1804
      %v1914 = vsel %vm412, %v1882, %v1806
      %v1915 = vsel %vm412, %v1883, %v1808
      %v1916 = vsel %vm412, %v1884, %v1810
      %v1917 = vsel %vm412, %v1885, %v1812
      %v1918 = vsel %vm412, %v1886, %v1814
      %v1919 = vsel %vm412, %v1887, %v1816
      %v1920 = vsel %vm412, %v1888, %v1818
      %v1921 = vsel %vm412, %v1889, %v1820
      %v1922 = vsel %vm412, %v1890, %v1822
      %v1923 = vsel %vm412, %v1891, %v1824
      %v1924 = vsel %vm412, %v1892, %v1826
      %v1925 = vsel %vm412, %v1893, %v1828
      %v1926 = vpack.c.bf16 %v1895, %v1894
      %v1927 = vpack.c.bf16 %v1897, %v1896
      %v1928 = vpack.c.bf16 %v1899, %v1898
      %v1929 = vpack.c.bf16 %v1901, %v1900
      %v1930 = vpack.c.bf16 %v1903, %v1902
      %v1931 = vpack.c.bf16 %v1905, %v1904
      %v1932 = vpack.c.bf16 %v1907, %v1906
      %v1933 = vpack.c.bf16 %v1909, %v1908
      %v1934 = vpack.c.bf16 %v1911, %v1910
      %v1935 = vpack.c.bf16 %v1913, %v1912
      %v1936 = vpack.c.bf16 %v1915, %v1914
      %v1937 = vpack.c.bf16 %v1917, %v1916
      %v1938 = vpack.c.bf16 %v1919, %v1918
      %v1939 = vpack.c.bf16 %v1921, %v1920
      %v1940 = vpack.c.bf16 %v1923, %v1922
      %v1941 = vpack.c.bf16 %v1925, %v1924
      %s1942 = smul.u32 %s23, 5
      %s1943 = smul.addr %s1942, 4
      %s1944 = scalar_lea.vmem %s4, %s1943
      %v1945 = vld [vmem:[%s1944] sm:$0xf]
      %v1946 = vld [vmem:[%s1944 + $0x4] sm:$0xf]
      %v1947 = vld [vmem:[%s1944 + $0x8] sm:$0xf]
      %v1948 = vld [vmem:[%s1944 + $0xc] sm:$0xf]
      %v1949 = vld [vmem:[%s1944 + $0x10] sm:$0x3]
      %v1952 = vunpack.c.l.b16 %v1945
      %v1953 = vunpack.c.l.b16 %v1946
      %v1954 = vpack.c.b16 %v1953, %v1952
      %vm1955 = vcmask 97280
      %v1957 = vsel %vm1955, %v1926, 0
      %v1960 = vsel %vm1955, %v1927, 0
      %v1963 = vsel %vm1955, %v1928, 0
      %v1966 = vsel %vm1955, %v1929, 0
      %v1969 = vsel %vm1955, %v1930, 0
      %v1972 = vsel %vm1955, %v1931, 0
      %v1975 = vsel %vm1955, %v1932, 0
      %v1978 = vsel %vm1955, %v1933, 0
      %v1981 = vsel %vm1955, %v1934, 0
      %v1984 = vsel %vm1955, %v1935, 0
      %v1987 = vsel %vm1955, %v1936, 0
      %v1990 = vsel %vm1955, %v1937, 0
      %v1993 = vsel %vm1955, %v1938, 0
      %v1996 = vsel %vm1955, %v1939, 0
      %v1999 = vsel %vm1955, %v1940, 0
      %vm2001 = vcmask 1045504
      %v2003 = vsel %vm2001, %v1954, 0
      %2005 = vmatprep.subr.bf16.mxu0 0
      %2006 = vmatpush1.bf16.msra.mxu0 0
      %2007 = vmatprep.subr.bf16.mxu0 0
      %2008 = vmatpush1.bf16.msra.mxu0 0
      %2009 = vmatprep.subr.bf16.mxu0 0
      %2010 = vmatpush1.bf16.msra.mxu0 0
      %2011 = vmatprep.subr.bf16.mxu0 0
      %2012 = vmatpush1.bf16.msra.mxu0 0
      %2013 = vmatprep.subr.bf16.mxu0 0
      %2014 = vmatpush1.bf16.msra.mxu0 0
      %2015 = vmatprep.subr.bf16.mxu0 0
      %2016 = vmatpush1.bf16.msra.mxu0 0
      %2017 = vmatprep.subr.bf16.mxu0 0
      %2018 = vmatpush1.bf16.msra.mxu0 0
      %2019 = vmatprep.subr.bf16.mxu0 0
      %2020 = vmatpush1.bf16.msra.mxu0 %v2003
      %2021 = vmatprep.subr.bf16.mxu0 0
      %2022 = vmatpush2.bf16.msra.mxu0 0
      %2023 = vmatprep.subr.bf16.mxu0 0
      %2024 = vmatpush2.bf16.msra.mxu0 0
      %2025 = vmatprep.subr.bf16.mxu0 0
      %2026 = vmatpush2.bf16.msra.mxu0 0
      %2027 = vmatprep.subr.bf16.mxu0 0
      %2028 = vmatpush2.bf16.msra.mxu0 0
      %2029 = vmatprep.subr.bf16.mxu0 0
      %2030 = vmatpush2.bf16.msra.mxu0 0
      %2031 = vmatprep.subr.bf16.mxu0 0
      %2032 = vmatpush2.bf16.msra.mxu0 0
      %2033 = vmatprep.subr.bf16.mxu0 0
      %2034 = vmatpush2.bf16.msra.mxu0 0
      %2035 = vmatprep.subr.bf16.mxu0 0
      %2036 = vmatpush2.bf16.msra.mxu0 0
      %2037 = vmatprep.mubr.bf16.mxu0 0
      %2038 = vmatmul.mubr.bf16.gmra.mxu0 %v1957
      %v2039 = vpop.f32.mrf.mxu0
      %v2040 = vadd.f32 0.0, %v2039
      %v2041 = vpop.f32.mrf.mxu0
      %v2042 = vpop.f32.mrf.mxu0
      %v2043 = vadd.f32 0.0, %v2042
      %v2044 = vpop.f32.mrf.mxu0
      %2045 = vmatprep.mubr.bf16.mxu0 0
      %2046 = vmatmul.mubr.bf16.gmra.mxu0 %v1960
      %v2047 = vpop.f32.mrf.mxu0
      %v2048 = vadd.f32 0.0, %v2047
      %v2049 = vpop.f32.mrf.mxu0
      %v2050 = vpop.f32.mrf.mxu0
      %v2051 = vadd.f32 0.0, %v2050
      %v2052 = vpop.f32.mrf.mxu0
      %2053 = vmatprep.mubr.bf16.mxu0 0
      %2054 = vmatmul.mubr.bf16.gmra.mxu0 %v1963
      %v2055 = vpop.f32.mrf.mxu0
      %v2056 = vadd.f32 0.0, %v2055
      %v2057 = vpop.f32.mrf.mxu0
      %v2058 = vpop.f32.mrf.mxu0
      %v2059 = vadd.f32 0.0, %v2058
      %v2060 = vpop.f32.mrf.mxu0
      %2061 = vmatprep.mubr.bf16.mxu0 0
      %2062 = vmatmul.mubr.bf16.gmra.mxu0 %v1966
      %v2063 = vpop.f32.mrf.mxu0
      %v2064 = vadd.f32 0.0, %v2063
      %v2065 = vpop.f32.mrf.mxu0
      %v2066 = vpop.f32.mrf.mxu0
      %v2067 = vadd.f32 0.0, %v2066
      %v2068 = vpop.f32.mrf.mxu0
      %2069 = vmatprep.mubr.bf16.mxu0 0
      %2070 = vmatmul.mubr.bf16.gmra.mxu0 %v1969
      %v2071 = vpop.f32.mrf.mxu0
      %v2072 = vadd.f32 0.0, %v2071
      %v2073 = vpop.f32.mrf.mxu0
      %v2074 = vpop.f32.mrf.mxu0
      %v2075 = vadd.f32 0.0, %v2074
      %v2076 = vpop.f32.mrf.mxu0
      %2077 = vmatprep.mubr.bf16.mxu0 0
      %2078 = vmatmul.mubr.bf16.gmra.mxu0 %v1972
      %v2079 = vpop.f32.mrf.mxu0
      %v2080 = vadd.f32 0.0, %v2079
      %v2081 = vpop.f32.mrf.mxu0
      %v2082 = vpop.f32.mrf.mxu0
      %v2083 = vadd.f32 0.0, %v2082
      %v2084 = vpop.f32.mrf.mxu0
      %2085 = vmatprep.mubr.bf16.mxu0 0
      %2086 = vmatmul.mubr.bf16.gmra.mxu0 %v1975
      %v2087 = vpop.f32.mrf.mxu0
      %v2088 = vadd.f32 0.0, %v2087
      %v2089 = vpop.f32.mrf.mxu0
      %v2090 = vpop.f32.mrf.mxu0
      %v2091 = vadd.f32 0.0, %v2090
      %v2092 = vpop.f32.mrf.mxu0
      %2093 = vmatprep.mubr.bf16.mxu0 0
      %2094 = vmatmul.mubr.bf16.gmra.mxu0 %v1978
      %v2095 = vpop.f32.mrf.mxu0
      %v2096 = vadd.f32 0.0, %v2095
      %v2097 = vpop.f32.mrf.mxu0
      %v2098 = vpop.f32.mrf.mxu0
      %v2099 = vadd.f32 0.0, %v2098
      %v2100 = vpop.f32.mrf.mxu0
      %2101 = vmatprep.mubr.bf16.mxu0 0
      %2102 = vmatmul.mubr.bf16.gmra.mxu0 %v1981
      %v2103 = vpop.f32.mrf.mxu0
      %v2104 = vadd.f32 0.0, %v2103
      %v2105 = vpop.f32.mrf.mxu0
      %v2106 = vpop.f32.mrf.mxu0
      %v2107 = vadd.f32 0.0, %v2106
      %v2108 = vpop.f32.mrf.mxu0
      %2109 = vmatprep.mubr.bf16.mxu0 0
      %2110 = vmatmul.mubr.bf16.gmra.mxu0 %v1984
      %v2111 = vpop.f32.mrf.mxu0
      %v2112 = vadd.f32 0.0, %v2111
      %v2113 = vpop.f32.mrf.mxu0
      %v2114 = vpop.f32.mrf.mxu0
      %v2115 = vadd.f32 0.0, %v2114
      %v2116 = vpop.f32.mrf.mxu0
      %2117 = vmatprep.mubr.bf16.mxu0 0
      %2118 = vmatmul.mubr.bf16.gmra.mxu0 %v1987
      %v2119 = vpop.f32.mrf.mxu0
      %v2120 = vadd.f32 0.0, %v2119
      %v2121 = vpop.f32.mrf.mxu0
      %v2122 = vpop.f32.mrf.mxu0
      %v2123 = vadd.f32 0.0, %v2122
      %v2124 = vpop.f32.mrf.mxu0
      %2125 = vmatprep.mubr.bf16.mxu0 0
      %2126 = vmatmul.mubr.bf16.gmra.mxu0 %v1990
      %v2127 = vpop.f32.mrf.mxu0
      %v2128 = vadd.f32 0.0, %v2127
      %v2129 = vpop.f32.mrf.mxu0
      %v2130 = vpop.f32.mrf.mxu0
      %v2131 = vadd.f32 0.0, %v2130
      %v2132 = vpop.f32.mrf.mxu0
      %2133 = vmatprep.mubr.bf16.mxu0 0
      %2134 = vmatmul.mubr.bf16.gmra.mxu0 %v1993
      %v2135 = vpop.f32.mrf.mxu0
      %v2136 = vadd.f32 0.0, %v2135
      %v2137 = vpop.f32.mrf.mxu0
      %v2138 = vpop.f32.mrf.mxu0
      %v2139 = vadd.f32 0.0, %v2138
      %v2140 = vpop.f32.mrf.mxu0
      %2141 = vmatprep.mubr.bf16.mxu0 0
      %2142 = vmatmul.mubr.bf16.gmra.mxu0 %v1996
      %v2143 = vpop.f32.mrf.mxu0
      %v2144 = vadd.f32 0.0, %v2143
      %v2145 = vpop.f32.mrf.mxu0
      %v2146 = vpop.f32.mrf.mxu0
      %v2147 = vadd.f32 0.0, %v2146
      %v2148 = vpop.f32.mrf.mxu0
      %2149 = vmatprep.mubr.bf16.mxu0 0
      %2150 = vmatmul.mubr.bf16.gmra.mxu0 %v1999
      %v2151 = vpop.f32.mrf.mxu0
      %v2152 = vadd.f32 0.0, %v2151
      %v2153 = vpop.f32.mrf.mxu0
      %v2154 = vpop.f32.mrf.mxu0
      %v2155 = vadd.f32 0.0, %v2154
      %v2156 = vpop.f32.mrf.mxu0
      %2157 = vdwg.mxu0
      %v2160 = vunpack.c.l.b16 %v1948
      %v2161 = vunpack.c.l.b16 %v1949
      %v2162 = vpack.c.b16 %v2161, %v2160
      %v2164 = vsel %vm1955, %v1941, 0
      %v2167 = vsel %vm2001, %v2162, 0
      %2169 = vmatprep.subr.bf16.mxu0 0
      %2170 = vmatpush1.bf16.msra.mxu0 0
      %2171 = vmatprep.subr.bf16.mxu0 0
      %2172 = vmatpush1.bf16.msra.mxu0 0
      %2173 = vmatprep.subr.bf16.mxu0 0
      %2174 = vmatpush1.bf16.msra.mxu0 0
      %2175 = vmatprep.subr.bf16.mxu0 0
      %2176 = vmatpush1.bf16.msra.mxu0 0
      %2177 = vmatprep.subr.bf16.mxu0 0
      %2178 = vmatpush1.bf16.msra.mxu0 0
      %2179 = vmatprep.subr.bf16.mxu0 0
      %2180 = vmatpush1.bf16.msra.mxu0 0
      %2181 = vmatprep.subr.bf16.mxu0 0
      %2182 = vmatpush1.bf16.msra.mxu0 0
      %2183 = vmatprep.subr.bf16.mxu0 0
      %2184 = vmatpush1.bf16.msra.mxu0 %v2167
      %2185 = vmatprep.subr.bf16.mxu0 0
      %2186 = vmatpush2.bf16.msra.mxu0 0
      %2187 = vmatprep.subr.bf16.mxu0 0
      %2188 = vmatpush2.bf16.msra.mxu0 0
      %2189 = vmatprep.subr.bf16.mxu0 0
      %2190 = vmatpush2.bf16.msra.mxu0 0
      %2191 = vmatprep.subr.bf16.mxu0 0
      %2192 = vmatpush2.bf16.msra.mxu0 0
      %2193 = vmatprep.subr.bf16.mxu0 0
      %2194 = vmatpush2.bf16.msra.mxu0 0
      %2195 = vmatprep.subr.bf16.mxu0 0
      %2196 = vmatpush2.bf16.msra.mxu0 0
      %2197 = vmatprep.subr.bf16.mxu0 0
      %2198 = vmatpush2.bf16.msra.mxu0 0
      %2199 = vmatprep.subr.bf16.mxu0 0
      %2200 = vmatpush2.bf16.msra.mxu0 0
      %2201 = vmatprep.mubr.bf16.mxu0 0
      %2202 = vmatmul.mubr.bf16.gmra.mxu0 %v1960
      %v2203 = vpop.f32.mrf.mxu0
      %v2204 = vadd.f32 0.0, %v2203
      %v2205 = vpop.f32.mrf.mxu0
      %v2206 = vpop.f32.mrf.mxu0
      %v2207 = vadd.f32 0.0, %v2206
      %v2208 = vpop.f32.mrf.mxu0
      %2209 = vmatprep.mubr.bf16.mxu0 0
      %2210 = vmatmul.mubr.bf16.gmra.mxu0 %v1963
      %v2211 = vpop.f32.mrf.mxu0
      %v2212 = vadd.f32 0.0, %v2211
      %v2213 = vpop.f32.mrf.mxu0
      %v2214 = vpop.f32.mrf.mxu0
      %v2215 = vadd.f32 0.0, %v2214
      %v2216 = vpop.f32.mrf.mxu0
      %2217 = vmatprep.mubr.bf16.mxu0 0
      %2218 = vmatmul.mubr.bf16.gmra.mxu0 %v1966
      %v2219 = vpop.f32.mrf.mxu0
      %v2220 = vadd.f32 0.0, %v2219
      %v2221 = vpop.f32.mrf.mxu0
      %v2222 = vpop.f32.mrf.mxu0
      %v2223 = vadd.f32 0.0, %v2222
      %v2224 = vpop.f32.mrf.mxu0
      %2225 = vmatprep.mubr.bf16.mxu0 0
      %2226 = vmatmul.mubr.bf16.gmra.mxu0 %v1969
      %v2227 = vpop.f32.mrf.mxu0
      %v2228 = vadd.f32 0.0, %v2227
      %v2229 = vpop.f32.mrf.mxu0
      %v2230 = vpop.f32.mrf.mxu0
      %v2231 = vadd.f32 0.0, %v2230
      %v2232 = vpop.f32.mrf.mxu0
      %2233 = vmatprep.mubr.bf16.mxu0 0
      %2234 = vmatmul.mubr.bf16.gmra.mxu0 %v1972
      %v2235 = vpop.f32.mrf.mxu0
      %v2236 = vadd.f32 0.0, %v2235
      %v2237 = vpop.f32.mrf.mxu0
      %v2238 = vpop.f32.mrf.mxu0
      %v2239 = vadd.f32 0.0, %v2238
      %v2240 = vpop.f32.mrf.mxu0
      %2241 = vmatprep.mubr.bf16.mxu0 0
      %2242 = vmatmul.mubr.bf16.gmra.mxu0 %v1975
      %v2243 = vpop.f32.mrf.mxu0
      %v2244 = vadd.f32 0.0, %v2243
      %v2245 = vpop.f32.mrf.mxu0
      %v2246 = vpop.f32.mrf.mxu0
      %v2247 = vadd.f32 0.0, %v2246
      %v2248 = vpop.f32.mrf.mxu0
      %2249 = vmatprep.mubr.bf16.mxu0 0
      %2250 = vmatmul.mubr.bf16.gmra.mxu0 %v1978
      %v2251 = vpop.f32.mrf.mxu0
      %v2252 = vadd.f32 0.0, %v2251
      %v2253 = vpop.f32.mrf.mxu0
      %v2254 = vpop.f32.mrf.mxu0
      %v2255 = vadd.f32 0.0, %v2254
      %v2256 = vpop.f32.mrf.mxu0
      %2257 = vmatprep.mubr.bf16.mxu0 0
      %2258 = vmatmul.mubr.bf16.gmra.mxu0 %v1981
      %v2259 = vpop.f32.mrf.mxu0
      %v2260 = vadd.f32 0.0, %v2259
      %v2261 = vpop.f32.mrf.mxu0
      %v2262 = vpop.f32.mrf.mxu0
      %v2263 = vadd.f32 0.0, %v2262
      %v2264 = vpop.f32.mrf.mxu0
      %2265 = vmatprep.mubr.bf16.mxu0 0
      %2266 = vmatmul.mubr.bf16.gmra.mxu0 %v1984
      %v2267 = vpop.f32.mrf.mxu0
      %v2268 = vadd.f32 0.0, %v2267
      %v2269 = vpop.f32.mrf.mxu0
      %v2270 = vpop.f32.mrf.mxu0
      %v2271 = vadd.f32 0.0, %v2270
      %v2272 = vpop.f32.mrf.mxu0
      %2273 = vmatprep.mubr.bf16.mxu0 0
      %2274 = vmatmul.mubr.bf16.gmra.mxu0 %v1987
      %v2275 = vpop.f32.mrf.mxu0
      %v2276 = vadd.f32 0.0, %v2275
      %v2277 = vpop.f32.mrf.mxu0
      %v2278 = vpop.f32.mrf.mxu0
      %v2279 = vadd.f32 0.0, %v2278
      %v2280 = vpop.f32.mrf.mxu0
      %2281 = vmatprep.mubr.bf16.mxu0 0
      %2282 = vmatmul.mubr.bf16.gmra.mxu0 %v1990
      %v2283 = vpop.f32.mrf.mxu0
      %v2284 = vadd.f32 0.0, %v2283
      %v2285 = vpop.f32.mrf.mxu0
      %v2286 = vpop.f32.mrf.mxu0
      %v2287 = vadd.f32 0.0, %v2286
      %v2288 = vpop.f32.mrf.mxu0
      %2289 = vmatprep.mubr.bf16.mxu0 0
      %2290 = vmatmul.mubr.bf16.gmra.mxu0 %v1993
      %v2291 = vpop.f32.mrf.mxu0
      %v2292 = vadd.f32 0.0, %v2291
      %v2293 = vpop.f32.mrf.mxu0
      %v2294 = vpop.f32.mrf.mxu0
      %v2295 = vadd.f32 0.0, %v2294
      %v2296 = vpop.f32.mrf.mxu0
      %2297 = vmatprep.mubr.bf16.mxu0 0
      %2298 = vmatmul.mubr.bf16.gmra.mxu0 %v1996
      %v2299 = vpop.f32.mrf.mxu0
      %v2300 = vadd.f32 0.0, %v2299
      %v2301 = vpop.f32.mrf.mxu0
      %v2302 = vpop.f32.mrf.mxu0
      %v2303 = vadd.f32 0.0, %v2302
      %v2304 = vpop.f32.mrf.mxu0
      %2305 = vmatprep.mubr.bf16.mxu0 0
      %2306 = vmatmul.mubr.bf16.gmra.mxu0 %v1999
      %v2307 = vpop.f32.mrf.mxu0
      %v2308 = vadd.f32 0.0, %v2307
      %v2309 = vpop.f32.mrf.mxu0
      %v2310 = vpop.f32.mrf.mxu0
      %v2311 = vadd.f32 0.0, %v2310
      %v2312 = vpop.f32.mrf.mxu0
      %2313 = vmatprep.mubr.bf16.mxu0 0
      %2314 = vmatmul.mubr.bf16.gmra.mxu0 %v2164
      %v2315 = vpop.f32.mrf.mxu0
      %v2316 = vadd.f32 0.0, %v2315
      %v2317 = vpop.f32.mrf.mxu0
      %v2318 = vpop.f32.mrf.mxu0
      %v2319 = vadd.f32 0.0, %v2318
      %v2320 = vpop.f32.mrf.mxu0
      %2321 = vdwg.mxu0
      %v2323 = vunpack.c.l.b16 %v1947
      %v2324 = vpack.c.b16 %v2323, %v1953
      %v2325 = vrot.slane %v2324, 2
      %v2327 = vsel %vm2001, %v2325, 0
      %2329 = vmatprep.subr.bf16.mxu0 0
      %2330 = vmatpush1.bf16.msra.mxu0 0
      %2331 = vmatprep.subr.bf16.mxu0 0
      %2332 = vmatpush1.bf16.msra.mxu0 0
      %2333 = vmatprep.subr.bf16.mxu0 0
      %2334 = vmatpush1.bf16.msra.mxu0 0
      %2335 = vmatprep.subr.bf16.mxu0 0
      %2336 = vmatpush1.bf16.msra.mxu0 0
      %2337 = vmatprep.subr.bf16.mxu0 0
      %2338 = vmatpush1.bf16.msra.mxu0 0
      %2339 = vmatprep.subr.bf16.mxu0 0
      %2340 = vmatpush1.bf16.msra.mxu0 0
      %2341 = vmatprep.subr.bf16.mxu0 0
      %2342 = vmatpush1.bf16.msra.mxu0 0
      %2343 = vmatprep.subr.bf16.mxu0 0
      %2344 = vmatpush1.bf16.msra.mxu0 %v2327
      %2345 = vmatprep.subr.bf16.mxu0 0
      %2346 = vmatpush2.bf16.msra.mxu0 0
      %2347 = vmatprep.subr.bf16.mxu0 0
      %2348 = vmatpush2.bf16.msra.mxu0 0
      %2349 = vmatprep.subr.bf16.mxu0 0
      %2350 = vmatpush2.bf16.msra.mxu0 0
      %2351 = vmatprep.subr.bf16.mxu0 0
      %2352 = vmatpush2.bf16.msra.mxu0 0
      %2353 = vmatprep.subr.bf16.mxu0 0
      %2354 = vmatpush2.bf16.msra.mxu0 0
      %2355 = vmatprep.subr.bf16.mxu0 0
      %2356 = vmatpush2.bf16.msra.mxu0 0
      %2357 = vmatprep.subr.bf16.mxu0 0
      %2358 = vmatpush2.bf16.msra.mxu0 0
      %2359 = vmatprep.subr.bf16.mxu0 0
      %2360 = vmatpush2.bf16.msra.mxu0 0
      %2361 = vmatprep.mubr.bf16.mxu0 0
      %2362 = vmatmul.mubr.bf16.gmra.mxu0 %v1957
      %v2363 = vpop.f32.mrf.mxu0
      %v2364 = vadd.f32 0.0, %v2363
      %v2365 = vpop.f32.mrf.mxu0
      %v2366 = vpop.f32.mrf.mxu0
      %v2367 = vadd.f32 0.0, %v2366
      %v2368 = vpop.f32.mrf.mxu0
      %2369 = vmatprep.mubr.bf16.mxu0 0
      %2370 = vmatmul.mubr.bf16.gmra.mxu0 %v1960
      %v2371 = vpop.f32.mrf.mxu0
      %v2372 = vadd.f32 %v2040, %v2371
      %v2373 = vpop.f32.mrf.mxu0
      %v2374 = vpop.f32.mrf.mxu0
      %v2375 = vadd.f32 %v2043, %v2374
      %v2376 = vpop.f32.mrf.mxu0
      %2377 = vmatprep.mubr.bf16.mxu0 0
      %2378 = vmatmul.mubr.bf16.gmra.mxu0 %v1963
      %v2379 = vpop.f32.mrf.mxu0
      %v2380 = vadd.f32 %v2048, %v2379
      %v2381 = vpop.f32.mrf.mxu0
      %v2382 = vpop.f32.mrf.mxu0
      %v2383 = vadd.f32 %v2051, %v2382
      %v2384 = vpop.f32.mrf.mxu0
      %2385 = vmatprep.mubr.bf16.mxu0 0
      %2386 = vmatmul.mubr.bf16.gmra.mxu0 %v1966
      %v2387 = vpop.f32.mrf.mxu0
      %v2388 = vadd.f32 %v2056, %v2387
      %v2389 = vpop.f32.mrf.mxu0
      %v2390 = vpop.f32.mrf.mxu0
      %v2391 = vadd.f32 %v2059, %v2390
      %v2392 = vpop.f32.mrf.mxu0
      %2393 = vmatprep.mubr.bf16.mxu0 0
      %2394 = vmatmul.mubr.bf16.gmra.mxu0 %v1969
      %v2395 = vpop.f32.mrf.mxu0
      %v2396 = vadd.f32 %v2064, %v2395
      %v2397 = vpop.f32.mrf.mxu0
      %v2398 = vpop.f32.mrf.mxu0
      %v2399 = vadd.f32 %v2067, %v2398
      %v2400 = vpop.f32.mrf.mxu0
      %2401 = vmatprep.mubr.bf16.mxu0 0
      %2402 = vmatmul.mubr.bf16.gmra.mxu0 %v1972
      %v2403 = vpop.f32.mrf.mxu0
      %v2404 = vadd.f32 %v2072, %v2403
      %v2405 = vpop.f32.mrf.mxu0
      %v2406 = vpop.f32.mrf.mxu0
      %v2407 = vadd.f32 %v2075, %v2406
      %v2408 = vpop.f32.mrf.mxu0
      %2409 = vmatprep.mubr.bf16.mxu0 0
      %2410 = vmatmul.mubr.bf16.gmra.mxu0 %v1975
      %v2411 = vpop.f32.mrf.mxu0
      %v2412 = vadd.f32 %v2080, %v2411
      %v2413 = vpop.f32.mrf.mxu0
      %v2414 = vpop.f32.mrf.mxu0
      %v2415 = vadd.f32 %v2083, %v2414
      %v2416 = vpop.f32.mrf.mxu0
      %2417 = vmatprep.mubr.bf16.mxu0 0
      %2418 = vmatmul.mubr.bf16.gmra.mxu0 %v1978
      %v2419 = vpop.f32.mrf.mxu0
      %v2420 = vadd.f32 %v2088, %v2419
      %v2421 = vpop.f32.mrf.mxu0
      %v2422 = vpop.f32.mrf.mxu0
      %v2423 = vadd.f32 %v2091, %v2422
      %v2424 = vpop.f32.mrf.mxu0
      %2425 = vmatprep.mubr.bf16.mxu0 0
      %2426 = vmatmul.mubr.bf16.gmra.mxu0 %v1981
      %v2427 = vpop.f32.mrf.mxu0
      %v2428 = vadd.f32 %v2096, %v2427
      %v2429 = vpop.f32.mrf.mxu0
      %v2430 = vpop.f32.mrf.mxu0
      %v2431 = vadd.f32 %v2099, %v2430
      %v2432 = vpop.f32.mrf.mxu0
      %2433 = vmatprep.mubr.bf16.mxu0 0
      %2434 = vmatmul.mubr.bf16.gmra.mxu0 %v1984
      %v2435 = vpop.f32.mrf.mxu0
      %v2436 = vadd.f32 %v2104, %v2435
      %v2437 = vpop.f32.mrf.mxu0
      %v2438 = vpop.f32.mrf.mxu0
      %v2439 = vadd.f32 %v2107, %v2438
      %v2440 = vpop.f32.mrf.mxu0
      %2441 = vmatprep.mubr.bf16.mxu0 0
      %2442 = vmatmul.mubr.bf16.gmra.mxu0 %v1987
      %v2443 = vpop.f32.mrf.mxu0
      %v2444 = vadd.f32 %v2112, %v2443
      %v2445 = vpop.f32.mrf.mxu0
      %v2446 = vpop.f32.mrf.mxu0
      %v2447 = vadd.f32 %v2115, %v2446
      %v2448 = vpop.f32.mrf.mxu0
      %2449 = vmatprep.mubr.bf16.mxu0 0
      %2450 = vmatmul.mubr.bf16.gmra.mxu0 %v1990
      %v2451 = vpop.f32.mrf.mxu0
      %v2452 = vadd.f32 %v2120, %v2451
      %v2453 = vpop.f32.mrf.mxu0
      %v2454 = vpop.f32.mrf.mxu0
      %v2455 = vadd.f32 %v2123, %v2454
      %v2456 = vpop.f32.mrf.mxu0
      %2457 = vmatprep.mubr.bf16.mxu0 0
      %2458 = vmatmul.mubr.bf16.gmra.mxu0 %v1993
      %v2459 = vpop.f32.mrf.mxu0
      %v2460 = vadd.f32 %v2128, %v2459
      %v2461 = vpop.f32.mrf.mxu0
      %v2462 = vpop.f32.mrf.mxu0
      %v2463 = vadd.f32 %v2131, %v2462
      %v2464 = vpop.f32.mrf.mxu0
      %2465 = vmatprep.mubr.bf16.mxu0 0
      %2466 = vmatmul.mubr.bf16.gmra.mxu0 %v1996
      %v2467 = vpop.f32.mrf.mxu0
      %v2468 = vadd.f32 %v2136, %v2467
      %v2469 = vpop.f32.mrf.mxu0
      %v2470 = vpop.f32.mrf.mxu0
      %v2471 = vadd.f32 %v2139, %v2470
      %v2472 = vpop.f32.mrf.mxu0
      %2473 = vmatprep.mubr.bf16.mxu0 0
      %2474 = vmatmul.mubr.bf16.gmra.mxu0 %v1999
      %v2475 = vpop.f32.mrf.mxu0
      %v2476 = vadd.f32 %v2144, %v2475
      %v2477 = vpop.f32.mrf.mxu0
      %v2478 = vpop.f32.mrf.mxu0
      %v2479 = vadd.f32 %v2147, %v2478
      %v2480 = vpop.f32.mrf.mxu0
      %2481 = vmatprep.mubr.bf16.mxu0 0
      %2482 = vmatmul.mubr.bf16.gmra.mxu0 %v2164
      %v2483 = vpop.f32.mrf.mxu0
      %v2484 = vadd.f32 %v2152, %v2483
      %v2485 = vpop.f32.mrf.mxu0
      %v2486 = vpop.f32.mrf.mxu0
      %v2487 = vadd.f32 %v2155, %v2486
      %v2488 = vpop.f32.mrf.mxu0
      %2489 = vdwg.mxu0
      %v2490 = vadd.f32 %v2364, %v2204
      %v2491 = vadd.f32 %v2367, %v2207
      %v2492 = vadd.f32 %v2372, %v2212
      %v2493 = vadd.f32 %v2375, %v2215
      %v2494 = vadd.f32 %v2380, %v2220
      %v2495 = vadd.f32 %v2383, %v2223
      %v2496 = vadd.f32 %v2388, %v2228
      %v2497 = vadd.f32 %v2391, %v2231
      %v2498 = vadd.f32 %v2396, %v2236
      %v2499 = vadd.f32 %v2399, %v2239
      %v2500 = vadd.f32 %v2404, %v2244
      %v2501 = vadd.f32 %v2407, %v2247
      %v2502 = vadd.f32 %v2412, %v2252
      %v2503 = vadd.f32 %v2415, %v2255
      %v2504 = vadd.f32 %v2420, %v2260
      %v2505 = vadd.f32 %v2423, %v2263
      %v2506 = vadd.f32 %v2428, %v2268
      %v2507 = vadd.f32 %v2431, %v2271
      %v2508 = vadd.f32 %v2436, %v2276
      %v2509 = vadd.f32 %v2439, %v2279
      %v2510 = vadd.f32 %v2444, %v2284
      %v2511 = vadd.f32 %v2447, %v2287
      %v2512 = vadd.f32 %v2452, %v2292
      %v2513 = vadd.f32 %v2455, %v2295
      %v2514 = vadd.f32 %v2460, %v2300
      %v2515 = vadd.f32 %v2463, %v2303
      %v2516 = vadd.f32 %v2468, %v2308
      %v2517 = vadd.f32 %v2471, %v2311
      %v2518 = vadd.f32 %v2476, %v2316
      %v2519 = vadd.f32 %v2479, %v2319
      %v2520 = vadd.f32 %v2484, 0.0
      %v2521 = vadd.f32 %v2487, 0.0
      %s2522 = scalar_lea.vmem %s5, %s23
      %v2523 = vld [vmem:[%s2522] sm:$0x1]
      %v2525 = vlaneseq
      %v2526 = vshrl.u32 %v2525, 7
      %v2527 = vsub.s32 0, %v2526
      %v2528 = vrot.slane %v2523, %v2527
      %v2530 = vmul.f32 %v2490, %v2528
      %v2531 = vmul.f32 %v2491, %v2528
      %v2532 = vmul.f32 %v2492, %v2528
      %v2533 = vmul.f32 %v2493, %v2528
      %v2534 = vmul.f32 %v2494, %v2528
      %v2535 = vmul.f32 %v2495, %v2528
      %v2536 = vmul.f32 %v2496, %v2528
      %v2537 = vmul.f32 %v2497, %v2528
      %v2538 = vmul.f32 %v2498, %v2528
      %v2539 = vmul.f32 %v2499, %v2528
      %v2540 = vmul.f32 %v2500, %v2528
      %v2541 = vmul.f32 %v2501, %v2528
      %v2542 = vmul.f32 %v2502, %v2528
      %v2543 = vmul.f32 %v2503, %v2528
      %v2544 = vmul.f32 %v2504, %v2528
      %v2545 = vmul.f32 %v2505, %v2528
      %v2546 = vmul.f32 %v2506, %v2528
      %v2547 = vmul.f32 %v2507, %v2528
      %v2548 = vmul.f32 %v2508, %v2528
      %v2549 = vmul.f32 %v2509, %v2528
      %v2550 = vmul.f32 %v2510, %v2528
      %v2551 = vmul.f32 %v2511, %v2528
      %v2552 = vmul.f32 %v2512, %v2528
      %v2553 = vmul.f32 %v2513, %v2528
      %v2554 = vmul.f32 %v2514, %v2528
      %v2555 = vmul.f32 %v2515, %v2528
      %v2556 = vmul.f32 %v2516, %v2528
      %v2557 = vmul.f32 %v2517, %v2528
      %v2558 = vmul.f32 %v2518, %v2528
      %v2559 = vmul.f32 %v2519, %v2528
      %v2560 = vmul.f32 %v2520, %v2528
      %v2561 = vmul.f32 %v2521, %v2528
      %s2562 = scalar_lea.vmem %s6, %s23
      %v2563 = vld [vmem:[%s2562] sm:$0x1]
      %v2565 = vlaneseq
      %v2566 = vshrl.u32 %v2565, 7
      %v2567 = vsub.s32 0, %v2566
      %v2568 = vrot.slane %v2563, %v2567
      %v2570 = vadd.f32 %v2530, %v2568
      %v2571 = vadd.f32 %v2531, %v2568
      %v2572 = vadd.f32 %v2532, %v2568
      %v2573 = vadd.f32 %v2533, %v2568
      %v2574 = vadd.f32 %v2534, %v2568
      %v2575 = vadd.f32 %v2535, %v2568
      %v2576 = vadd.f32 %v2536, %v2568
      %v2577 = vadd.f32 %v2537, %v2568
      %v2578 = vadd.f32 %v2538, %v2568
      %v2579 = vadd.f32 %v2539, %v2568
      %v2580 = vadd.f32 %v2540, %v2568
      %v2581 = vadd.f32 %v2541, %v2568
      %v2582 = vadd.f32 %v2542, %v2568
      %v2583 = vadd.f32 %v2543, %v2568
      %v2584 = vadd.f32 %v2544, %v2568
      %v2585 = vadd.f32 %v2545, %v2568
      %v2586 = vadd.f32 %v2546, %v2568
      %v2587 = vadd.f32 %v2547, %v2568
      %v2588 = vadd.f32 %v2548, %v2568
      %v2589 = vadd.f32 %v2549, %v2568
      %v2590 = vadd.f32 %v2550, %v2568
      %v2591 = vadd.f32 %v2551, %v2568
      %v2592 = vadd.f32 %v2552, %v2568
      %v2593 = vadd.f32 %v2553, %v2568
      %v2594 = vadd.f32 %v2554, %v2568
      %v2595 = vadd.f32 %v2555, %v2568
      %v2596 = vadd.f32 %v2556, %v2568
      %v2597 = vadd.f32 %v2557, %v2568
      %v2598 = vadd.f32 %v2558, %v2568
      %v2599 = vadd.f32 %v2559, %v2568
      %v2600 = vadd.f32 %v2560, %v2568
      %v2601 = vadd.f32 %v2561, %v2568
      %vm2602 = vcmp.gt.f32.partialorder %v2570, 0.0
      %vm2603 = vcmp.gt.f32.partialorder %v2571, 0.0
      %vm2604 = vcmp.gt.f32.partialorder %v2572, 0.0
      %vm2605 = vcmp.gt.f32.partialorder %v2573, 0.0
      %vm2606 = vcmp.gt.f32.partialorder %v2574, 0.0
      %vm2607 = vcmp.gt.f32.partialorder %v2575, 0.0
      %vm2608 = vcmp.gt.f32.partialorder %v2576, 0.0
      %vm2609 = vcmp.gt.f32.partialorder %v2577, 0.0
      %vm2610 = vcmp.gt.f32.partialorder %v2578, 0.0
      %vm2611 = vcmp.gt.f32.partialorder %v2579, 0.0
      %vm2612 = vcmp.gt.f32.partialorder %v2580, 0.0
      %vm2613 = vcmp.gt.f32.partialorder %v2581, 0.0
      %vm2614 = vcmp.gt.f32.partialorder %v2582, 0.0
      %vm2615 = vcmp.gt.f32.partialorder %v2583, 0.0
      %vm2616 = vcmp.gt.f32.partialorder %v2584, 0.0
      %vm2617 = vcmp.gt.f32.partialorder %v2585, 0.0
      %vm2618 = vcmp.gt.f32.partialorder %v2586, 0.0
      %vm2619 = vcmp.gt.f32.partialorder %v2587, 0.0
      %vm2620 = vcmp.gt.f32.partialorder %v2588, 0.0
      %vm2621 = vcmp.gt.f32.partialorder %v2589, 0.0
      %vm2622 = vcmp.gt.f32.partialorder %v2590, 0.0
      %vm2623 = vcmp.gt.f32.partialorder %v2591, 0.0
      %vm2624 = vcmp.gt.f32.partialorder %v2592, 0.0
      %vm2625 = vcmp.gt.f32.partialorder %v2593, 0.0
      %vm2626 = vcmp.gt.f32.partialorder %v2594, 0.0
      %vm2627 = vcmp.gt.f32.partialorder %v2595, 0.0
      %vm2628 = vcmp.gt.f32.partialorder %v2596, 0.0
      %vm2629 = vcmp.gt.f32.partialorder %v2597, 0.0
      %vm2630 = vcmp.gt.f32.partialorder %v2598, 0.0
      %vm2631 = vcmp.gt.f32.partialorder %v2599, 0.0
      %vm2632 = vcmp.gt.f32.partialorder %v2600, 0.0
      %vm2633 = vcmp.gt.f32.partialorder %v2601, 0.0
      %v2634 = vmul.f32 %v2570, 0.1
      %v2635 = vmul.f32 %v2571, 0.1
      %v2636 = vmul.f32 %v2572, 0.1
      %v2637 = vmul.f32 %v2573, 0.1
      %v2638 = vmul.f32 %v2574, 0.1
      %v2639 = vmul.f32 %v2575, 0.1
      %v2640 = vmul.f32 %v2576, 0.1
      %v2641 = vmul.f32 %v2577, 0.1
      %v2642 = vmul.f32 %v2578, 0.1
      %v2643 = vmul.f32 %v2579, 0.1
      %v2644 = vmul.f32 %v2580, 0.1
      %v2645 = vmul.f32 %v2581, 0.1
      %v2646 = vmul.f32 %v2582, 0.1
      %v2647 = vmul.f32 %v2583, 0.1
      %v2648 = vmul.f32 %v2584, 0.1
      %v2649 = vmul.f32 %v2585, 0.1
      %v2650 = vmul.f32 %v2586, 0.1
      %v2651 = vmul.f32 %v2587, 0.1
      %v2652 = vmul.f32 %v2588, 0.1
      %v2653 = vmul.f32 %v2589, 0.1
      %v2654 = vmul.f32 %v2590, 0.1
      %v2655 = vmul.f32 %v2591, 0.1
      %v2656 = vmul.f32 %v2592, 0.1
      %v2657 = vmul.f32 %v2593, 0.1
      %v2658 = vmul.f32 %v2594, 0.1
      %v2659 = vmul.f32 %v2595, 0.1
      %v2660 = vmul.f32 %v2596, 0.1
      %v2661 = vmul.f32 %v2597, 0.1
      %v2662 = vmul.f32 %v2598, 0.1
      %v2663 = vmul.f32 %v2599, 0.1
      %v2664 = vmul.f32 %v2600, 0.1
      %v2665 = vmul.f32 %v2601, 0.1
      %v2666 = vsel %vm2602, %v2570, %v2634
      %v2667 = vsel %vm2603, %v2571, %v2635
      %v2668 = vsel %vm2604, %v2572, %v2636
      %v2669 = vsel %vm2605, %v2573, %v2637
      %v2670 = vsel %vm2606, %v2574, %v2638
      %v2671 = vsel %vm2607, %v2575, %v2639
      %v2672 = vsel %vm2608, %v2576, %v2640
      %v2673 = vsel %vm2609, %v2577, %v2641
      %v2674 = vsel %vm2610, %v2578, %v2642
      %v2675 = vsel %vm2611, %v2579, %v2643
      %v2676 = vsel %vm2612, %v2580, %v2644
      %v2677 = vsel %vm2613, %v2581, %v2645
      %v2678 = vsel %vm2614, %v2582, %v2646
      %v2679 = vsel %vm2615, %v2583, %v2647
      %v2680 = vsel %vm2616, %v2584, %v2648
      %v2681 = vsel %vm2617, %v2585, %v2649
      %v2682 = vsel %vm2618, %v2586, %v2650
      %v2683 = vsel %vm2619, %v2587, %v2651
      %v2684 = vsel %vm2620, %v2588, %v2652
      %v2685 = vsel %vm2621, %v2589, %v2653
      %v2686 = vsel %vm2622, %v2590, %v2654
      %v2687 = vsel %vm2623, %v2591, %v2655
      %v2688 = vsel %vm2624, %v2592, %v2656
      %v2689 = vsel %vm2625, %v2593, %v2657
      %v2690 = vsel %vm2626, %v2594, %v2658
      %v2691 = vsel %vm2627, %v2595, %v2659
      %v2692 = vsel %vm2628, %v2596, %v2660
      %v2693 = vsel %vm2629, %v2597, %v2661
      %v2694 = vsel %vm2630, %v2598, %v2662
      %v2695 = vsel %vm2631, %v2599, %v2663
      %v2696 = vsel %vm2632, %v2600, %v2664
      %v2697 = vsel %vm2633, %v2601, %v2665
      %v2698 = vadd.f32 %v361, %v2666
      %v2699 = vadd.f32 %v362, %v2667
      %v2700 = vadd.f32 %v363, %v2668
      %v2701 = vadd.f32 %v364, %v2669
      %v2702 = vadd.f32 %v365, %v2670
      %v2703 = vadd.f32 %v366, %v2671
      %v2704 = vadd.f32 %v367, %v2672
      %v2705 = vadd.f32 %v368, %v2673
      %v2706 = vadd.f32 %v369, %v2674
      %v2707 = vadd.f32 %v370, %v2675
      %v2708 = vadd.f32 %v371, %v2676
      %v2709 = vadd.f32 %v372, %v2677
      %v2710 = vadd.f32 %v373, %v2678
      %v2711 = vadd.f32 %v374, %v2679
      %v2712 = vadd.f32 %v375, %v2680
      %v2713 = vadd.f32 %v376, %v2681
      %v2714 = vadd.f32 %v377, %v2682
      %v2715 = vadd.f32 %v378, %v2683
      %v2716 = vadd.f32 %v379, %v2684
      %v2717 = vadd.f32 %v380, %v2685
      %v2718 = vadd.f32 %v381, %v2686
      %v2719 = vadd.f32 %v382, %v2687
      %v2720 = vadd.f32 %v383, %v2688
      %v2721 = vadd.f32 %v384, %v2689
      %v2722 = vadd.f32 %v385, %v2690
      %v2723 = vadd.f32 %v386, %v2691
      %v2724 = vadd.f32 %v387, %v2692
      %v2725 = vadd.f32 %v388, %v2693
      %v2726 = vadd.f32 %v389, %v2694
      %v2727 = vadd.f32 %v390, %v2695
      %v2728 = vadd.f32 %v391, %v2696
      %v2729 = vadd.f32 %v392, %v2697
      %2730 = vst.msk [vmem:[%s290] sm:$0xff] %vm412, %v2698
      %2731 = vst.msk [vmem:[%s290 + $0x8] sm:$0xff] %vm412, %v2699
      %2732 = vst.msk [vmem:[%s290 + $0x10] sm:$0xff] %vm412, %v2700
      %2733 = vst.msk [vmem:[%s290 + $0x18] sm:$0xff] %vm412, %v2701
      %2734 = vst.msk [vmem:[%s290 + $0x20] sm:$0xff] %vm412, %v2702
      %2735 = vst.msk [vmem:[%s290 + $0x28] sm:$0xff] %vm412, %v2703
      %2736 = vst.msk [vmem:[%s290 + $0x30] sm:$0xff] %vm412, %v2704
      %2737 = vst.msk [vmem:[%s290 + $0x38] sm:$0xff] %vm412, %v2705
      %2738 = vst.msk [vmem:[%s290 + $0x40] sm:$0xff] %vm412, %v2706
      %2739 = vst.msk [vmem:[%s290 + $0x48] sm:$0xff] %vm412, %v2707
      %2740 = vst.msk [vmem:[%s290 + $0x50] sm:$0xff] %vm412, %v2708
      %2741 = vst.msk [vmem:[%s290 + $0x58] sm:$0xff] %vm412, %v2709
      %2742 = vst.msk [vmem:[%s290 + $0x60] sm:$0xff] %vm412, %v2710
      %2743 = vst.msk [vmem:[%s290 + $0x68] sm:$0xff] %vm412, %v2711
      %2744 = vst.msk [vmem:[%s290 + $0x70] sm:$0xff] %vm412, %v2712
      %2745 = vst.msk [vmem:[%s290 + $0x78] sm:$0xff] %vm412, %v2713
      %2746 = vst.msk [vmem:[%s290 + $0x80] sm:$0xff] %vm412, %v2714
      %2747 = vst.msk [vmem:[%s290 + $0x88] sm:$0xff] %vm412, %v2715
      %2748 = vst.msk [vmem:[%s290 + $0x90] sm:$0xff] %vm412, %v2716
      %2749 = vst.msk [vmem:[%s290 + $0x98] sm:$0xff] %vm412, %v2717
      %2750 = vst.msk [vmem:[%s290 + $0xa0] sm:$0xff] %vm412, %v2718
      %2751 = vst.msk [vmem:[%s290 + $0xa8] sm:$0xff] %vm412, %v2719
      %2752 = vst.msk [vmem:[%s290 + $0xb0] sm:$0xff] %vm412, %v2720
      %2753 = vst.msk [vmem:[%s290 + $0xb8] sm:$0xff] %vm412, %v2721
      %2754 = vst.msk [vmem:[%s290 + $0xc0] sm:$0xff] %vm412, %v2722
      %2755 = vst.msk [vmem:[%s290 + $0xc8] sm:$0xff] %vm412, %v2723
      %2756 = vst.msk [vmem:[%s290 + $0xd0] sm:$0xff] %vm412, %v2724
      %2757 = vst.msk [vmem:[%s290 + $0xd8] sm:$0xff] %vm412, %v2725
      %2758 = vst.msk [vmem:[%s290 + $0xe0] sm:$0xff] %vm412, %v2726
      %2759 = vst.msk [vmem:[%s290 + $0xe8] sm:$0xff] %vm412, %v2727
      %2760 = vst.msk [vmem:[%s290 + $0xf0] sm:$0xff] %vm412, %v2728
      %2761 = vst.msk [vmem:[%s290 + $0xf8] sm:$0xff] %vm412, %v2729
      %p2762 = scmp.lt.s32.totalorder %s22, 1
      %s2763 = scalar_select %p2762, %s22, 1
      %s2764 = smul.addr %s2763, 32
      %s2765 = smul.addr %s2764, 8
      %s2766 = scalar_lea.vmem %s7, %s2765
      // Predicated region
      $region53: #{tpu_custom_call.1} parent=47 // pred_check
        %p2767 = pneg %p200
      $region54: #{tpu_custom_call.1} parent=47 // pred_check_branch
        %2769 = sbr.rel (%p2767) target = $region56
      $region55: #{tpu_custom_call.1} parent=47 // pred_region
        _
      $region56: #{tpu_custom_call.1} parent=47 // pred_fallthru
        _
    $region48: #{tpu_custom_call.1} parent=5 // pred_fallthru
      _
    %p2770 = scmp.le.s32.totalorder 2, %s13
    // Predicated region
    $region57: #{tpu_custom_call.1} parent=5 // pred_check
      %p2771 = pneg %p2770
    $region58: #{tpu_custom_call.1} parent=5 // pred_check_branch
      %2773 = sbr.rel (%p2771) target = $region60
    $region59: #{tpu_custom_call.1} parent=5 // pred_region
      %s2774 = ssub.s32 %s13, 2
      // Predicated region
      $region61: #{tpu_custom_call.1} parent=59 // pred_check
        %p2775 = pneg %p206
      $region62: #{tpu_custom_call.1} parent=59 // pred_check_branch
        %2777 = sbr.rel (%p2775) target = $region64
      $region63: #{tpu_custom_call.1} parent=59 // pred_region
        %p2778 = scmp.lt.s32.totalorder %s24, 1
        %s2779 = scalar_select %p2778, %s24, 1
        %s2780 = smul.addr %s2779, 32
        %s2781 = smul.addr %s2780, 8
        %s2782 = scalar_lea.vmem %s7, %s2781
      $region64: #{tpu_custom_call.1} parent=59 // pred_fallthru
        _
    $region60: #{tpu_custom_call.1} parent=5 // pred_fallthru
      _
  $region6: #{tpu_custom_call.1} parent=0 // loop_footer
    %s17 = sadd.s32 1, %s13
  $region7: #{tpu_custom_call.1} parent=0 // loop_footer_branch
    %12 = sbr.rel target = $region3
  $region8: #{tpu_custom_call.1} parent=0 // loop_exit
    _

</llo_original>
